<compile_context>
chip_gen: v7x
topology: tpu7x:2x2x1
jax: 0.10.0
libtpu: 0.0.40
codegen_flags: <defaults>
</compile_context>

<pallas_src>
import math
import jax
import jax.numpy as jnp
from jax.experimental import pallas as pl
from jax.experimental.pallas import tpu as pltpu

# ----- small synthetic config (mirrors the module's __init__ shape logic) -----
VOCAB = 256
HIDDEN = 128
N_HEADS = 4
N_KV_HEADS = 2
HEAD_DIM = HIDDEN // N_HEADS          # 32
INTER = 256
N_LAYERS = 2
EPS = 1e-6
ROPE_THETA = 10000.0

Q_SIZE = N_HEADS * HEAD_DIM           # 128
KV_SIZE = N_KV_HEADS * HEAD_DIM       # 64
KV_REP = N_HEADS // N_KV_HEADS        # 2
QKV_SIZE = Q_SIZE + 2 * KV_SIZE       # 256
ROT_SIZE = Q_SIZE + KV_SIZE           # 192
SCORE_PAD = 128                       # lane-dense score output block


# ------------------------------ kernel helpers ------------------------------

def _rms(x):
    """RMS normalization body (f32, VPU)."""
    var = jnp.mean(x * x, axis=-1, keepdims=True)
    return x * jax.lax.rsqrt(var + EPS)


# ----------------------------- fused model kernel ----------------------------

def _model_kernel(seqlens_ref,                       # scalar-prefetch (SMEM)
                  h0_ref, cos_ref, sin_ref,
                  attn_norm_ref, wqkv_ref, wqk_rot_ref, wo_ref,
                  ffn_norm_ref, w1_ref, w3_ref, w2_ref,
                  final_norm_ref, vhead_ref,
                  score_ref,
                  resid_ref, attn_ref):
    b = pl.program_id(0)
    l = pl.program_id(1)

    # layer 0: load the embedding block into the resident f32 residual stream
    @pl.when(l == 0)
    def _():
        resid_ref[...] = h0_ref[0].astype(jnp.float32)

    resid = resid_ref[...]                           # [S, H] f32
    S = resid.shape[0]
    cosv = cos_ref[...]                              # [S, Q_SIZE] f32 (head-tiled)
    sinv = sin_ref[...]

    # ---- attention RMSNorm + packed QKV (+rotated QK) projections ----------
    normed1 = _rms(resid) * attn_norm_ref[0]
    nb = normed1.astype(jnp.bfloat16)
    qkv = jnp.dot(nb, wqkv_ref[0], preferred_element_type=jnp.float32)     # [S,256]
    qk_rot = jnp.dot(nb, wqk_rot_ref[0], preferred_element_type=jnp.float32)  # [S,192]

    q = qkv[:, :Q_SIZE]
    k = qkv[:, Q_SIZE:Q_SIZE + KV_SIZE]
    v = qkv[:, Q_SIZE + KV_SIZE:]
    q_rot = qk_rot[:, :Q_SIZE]                       # == rotate_half(q), exact
    k_rot = qk_rot[:, Q_SIZE:]                       # == rotate_half(k), exact

    # RoPE on packed blocks (pure VPU, no per-head slicing); scale folded in q.
    scale = 1.0 / math.sqrt(HEAD_DIM)
    q = (q * cosv + q_rot * sinv) * scale
    k = k * cosv[:, :KV_SIZE] + k_rot * sinv[:, :KV_SIZE]

    qb = q.astype(jnp.bfloat16)
    kb = k.astype(jnp.bfloat16)
    vb = v.astype(jnp.bfloat16)

    rows = jax.lax.broadcasted_iota(jnp.int32, (S, S), 0)
    cols = jax.lax.broadcasted_iota(jnp.int32, (S, S), 1)
    causal = cols <= rows

    # Causal GQA SDPA; bf16 MXU operands, f32 accumulation, exact softmax
    # normalization; per-head outputs go to a lane-dense VMEM scratch.
    # (At real head counts this unrolled loop should become group-batched
    #  matmuls inside lax.fori_loop(unroll=True).)
    for h in range(N_HEADS):
        g = h // KV_REP                              # GQA q-head -> kv-head
        qh = qb[:, h * HEAD_DIM:(h + 1) * HEAD_DIM]
        kg = kb[:, g * HEAD_DIM:(g + 1) * HEAD_DIM]
        vg = vb[:, g * HEAD_DIM:(g + 1) * HEAD_DIM]
        sc = jax.lax.dot_general(qh, kg, (((1,), (1,)), ((), ())),
                                 preferred_element_type=jnp.float32)   # [S,S]
        sc = jnp.where(causal, sc, jnp.float32(-1e30))
        m = jnp.max(sc, axis=-1, keepdims=True)
        p = jnp.exp(sc - m)
        denom = jnp.sum(p, axis=-1, keepdims=True)
        o_h = jax.lax.dot_general(p.astype(jnp.bfloat16), vg,
                                  (((1,), (0,)), ((), ())),
                                  preferred_element_type=jnp.float32)  # [S,Dh]
        attn_ref[:, h * HEAD_DIM:(h + 1) * HEAD_DIM] = o_h / denom

    # ---- output projection + residual add ----------------------------------
    resid = resid + jnp.dot(attn_ref[...].astype(jnp.bfloat16), wo_ref[0],
                            preferred_element_type=jnp.float32)

    # ---- FFN RMSNorm + SwiGLU MLP + residual add ----------------------------
    normed2 = _rms(resid) * ffn_norm_ref[0]
    nb2 = normed2.astype(jnp.bfloat16)
    gate = jnp.dot(nb2, w1_ref[0], preferred_element_type=jnp.float32)
    up = jnp.dot(nb2, w3_ref[0], preferred_element_type=jnp.float32)
    act = (gate * jax.nn.sigmoid(gate)) * up
    resid = resid + jnp.dot(act.astype(jnp.bfloat16), w2_ref[0],
                            preferred_element_type=jnp.float32)
    resid_ref[...] = resid

    # ---- last layer: fused LAST-token pooler + final norm + v_head ---------
    @pl.when(l == pl.num_programs(1) - 1)
    def _():
        last = jnp.maximum(seqlens_ref[b] - 1, 0)
        pooled = resid_ref[pl.ds(last, 1), :]                      # [1, H]
        normed = _rms(pooled) * final_norm_ref[...]
        score = jnp.sum(normed * vhead_ref[...], axis=-1, keepdims=True)  # [1,1]
        score_ref[0] = jnp.broadcast_to(score, (1, SCORE_PAD))


# --------------------------------- JAX glue ----------------------------------

def _rotate_weight_cols(w, n_heads):
    """Fold rotate_half into a projection weight: (x @ w) rotated == x @ w_rot.
    Exact (pure column permutation + negation of the bf16 weight)."""
    half = HEAD_DIM // 2
    w4 = w.reshape(HIDDEN, n_heads, 2, half)
    return jnp.concatenate([-w4[:, :, 1, :], w4[:, :, 0, :]],
                           axis=2).reshape(HIDDEN, n_heads * HEAD_DIM)


def rotary_tables_packed(pos_row):
    """Head-tiled cos/sin tables [S, Q_SIZE] (rotate-half layout).
    TODO(synk): positions are assumed shared across the batch (as in the toy
    input); per-sequence positions would need per-batch tables."""
    inv_freq = 1.0 / (ROPE_THETA ** (
        jnp.arange(0, HEAD_DIM, 2, dtype=jnp.float32) / HEAD_DIM))
    freqs = pos_row.astype(jnp.float32)[:, None] * inv_freq        # [S, Dh/2]
    emb = jnp.concatenate([freqs, freqs], axis=-1)                 # [S, Dh]
    emb_q = jnp.tile(emb, (1, N_HEADS))                            # [S, Q_SIZE]
    return jnp.cos(emb_q), jnp.sin(emb_q)


def init_params(key):
    keys = jax.random.split(key, 2 + N_LAYERS)
    scale = 0.02
    attn_norm, ffn_norm, wqkv, wo, w1, w3, w2 = [], [], [], [], [], [], []
    for li in range(N_LAYERS):
        lk = jax.random.split(keys[2 + li], 5)
        attn_norm.append(jnp.ones((1, HIDDEN), jnp.float32))
        ffn_norm.append(jnp.ones((1, HIDDEN), jnp.float32))
        # MXU operands stored in bf16 (f32 accumulation inside the kernel).
        # TODO(synk): real InternLM2 checkpoints pack wqkv grouped per kv-head
        # ((rep q-heads, k, v) interleaved); loading them requires a host-side
        # column permutation into this contiguous [Q|K|V] layout.
        wqkv.append((jax.random.normal(lk[0], (HIDDEN, QKV_SIZE)) * scale).astype(jnp.bfloat16))
        wo.append((jax.random.normal(lk[1], (HIDDEN, HIDDEN)) * scale).astype(jnp.bfloat16))
        w1.append((jax.random.normal(lk[2], (HIDDEN, INTER)) * scale).astype(jnp.bfloat16))
        w3.append((jax.random.normal(lk[3], (HIDDEN, INTER)) * scale).astype(jnp.bfloat16))
        w2.append((jax.random.normal(lk[4], (INTER, HIDDEN)) * scale).astype(jnp.bfloat16))
    wqk_rot = [jnp.concatenate(
        [_rotate_weight_cols(w[:, :Q_SIZE], N_HEADS),
         _rotate_weight_cols(w[:, Q_SIZE:Q_SIZE + KV_SIZE], N_KV_HEADS)],
        axis=1) for w in wqkv]
    return {
        "tok_emb": jax.random.normal(keys[0], (VOCAB, HIDDEN), jnp.float32) * scale,
        "final_norm": jnp.ones((1, HIDDEN), jnp.float32),
        "v_head": jax.random.normal(keys[1], (1, HIDDEN), jnp.float32) * scale,
        "attn_norm": jnp.stack(attn_norm),     # [L, 1, H]
        "ffn_norm": jnp.stack(ffn_norm),       # [L, 1, H]
        "wqkv": jnp.stack(wqkv),               # [L, H, QKV_SIZE]  bf16
        "wqk_rot": jnp.stack(wqk_rot),         # [L, H, ROT_SIZE]  bf16
        "wo": jnp.stack(wo),                   # [L, H, H]         bf16
        "w1": jnp.stack(w1),                   # [L, H, INTER]     bf16
        "w3": jnp.stack(w3),                   # [L, H, INTER]     bf16
        "w2": jnp.stack(w2),                   # [L, INTER, H]     bf16
    }


def forward(params, input_ids, positions, seq_lens):
    """InternLM2ForRewardModel.forward with get_embedding=True -> [B, 1]."""
    B, S = input_ids.shape
    # TODO(synk): token embedding lookup stays an XLA gather (no clean tiled
    # Pallas equivalent at this size); SGLang's ForwardBatch / radix paged
    # attention is replaced by dense causal attention over fixed sequences.
    h0 = jnp.take(params["tok_emb"], input_ids, axis=0).astype(jnp.bfloat16)
    cos_q, sin_q = rotary_tables_packed(positions[0])              # [S, Q_SIZE]

    row_spec = pl.BlockSpec((1, S, HIDDEN), lambda b, l, sl: (b, 0, 0))

    def const_spec(shape):
        return pl.BlockSpec(shape, lambda b, l, sl: (0,) * len(shape))

    def layer_spec(shape):
        return pl.BlockSpec(shape, lambda b, l, sl: (l,) + (0,) * (len(shape) - 1))

    scores_pad = pl.pallas_call(
        _model_kernel,
        out_shape=jax.ShapeDtypeStruct((B, 1, SCORE_PAD), jnp.float32),
        grid_spec=pltpu.PrefetchScalarGridSpec(
            num_scalar_prefetch=1,                    # seq_lens -> SMEM
            grid=(B, N_LAYERS),
            in_specs=[
                row_spec,                             # h0        (bf16)
                const_spec((S, Q_SIZE)),              # cos       (shared B & L)
                const_spec((S, Q_SIZE)),              # sin
                layer_spec((1, 1, HIDDEN)),           # attn_norm
                layer_spec((1, HIDDEN, QKV_SIZE)),    # wqkv      (bf16)
                layer_spec((1, HIDDEN, ROT_SIZE)),    # wqk_rot   (bf16)
                layer_spec((1, HIDDEN, HIDDEN)),      # wo        (bf16)
                layer_spec((1, 1, HIDDEN)),           # ffn_norm
                layer_spec((1, HIDDEN, INTER)),       # w1        (bf16)
                layer_spec((1, HIDDEN, INTER)),       # w3        (bf16)
                layer_spec((1, INTER, HIDDEN)),       # w2        (bf16)
                const_spec((1, HIDDEN)),              # final_norm
                const_spec((1, HIDDEN)),              # v_head row
            ],
            out_specs=pl.BlockSpec((1, 1, SCORE_PAD), lambda b, l, sl: (b, 0, 0)),
            scratch_shapes=[pltpu.VMEM((S, HIDDEN), jnp.float32),   # residual stream
                            pltpu.VMEM((S, HIDDEN), jnp.float32)],  # attn head staging
        ),
        compiler_params=pltpu.CompilerParams(
            dimension_semantics=("parallel", "arbitrary"),
            vmem_limit_bytes=32 * 1024 * 1024),
    )(seq_lens, h0, cos_q, sin_q,
      params["attn_norm"], params["wqkv"], params["wqk_rot"], params["wo"],
      params["ffn_norm"], params["w1"], params["w3"], params["w2"],
      params["final_norm"], params["v_head"])

    return scores_pad[:, 0, :1]                       # [B, 1]


if __name__ == "__main__":
    key = jax.random.PRNGKey(0)
    pkey, ikey = jax.random.split(key)
    params = init_params(pkey)

    B, S = 2, 8
    input_ids = jax.random.randint(ikey, (B, S), 0, VOCAB, dtype=jnp.int32)
    positions = jnp.broadcast_to(jnp.arange(S, dtype=jnp.int32), (B, S))
    seq_lens = jnp.array([S, S - 2], dtype=jnp.int32)

    scores = jax.jit(forward)(params, input_ids, positions, seq_lens)
    jax.block_until_ready(scores)
    assert scores.shape == (B, 1) and scores.dtype == jnp.float32
    assert bool(jnp.all(jnp.isfinite(scores)))
    print("KERNEL_OK")
</pallas_src>

<mosaic_0001>
module attributes {stable_mosaic.version = 11 : i64} {
  func.func @_model_kernel(%arg0: i32, %arg1: i32, %arg2: memref<2xi32, #tpu.memory_space<smem>>, %arg3: memref<1x8x128xbf16, #tpu.memory_space<vmem>>, %arg4: memref<8x128xf32, #tpu.memory_space<vmem>>, %arg5: memref<8x128xf32, #tpu.memory_space<vmem>>, %arg6: memref<1x1x128xf32, #tpu.memory_space<vmem>>, %arg7: memref<1x128x256xbf16, #tpu.memory_space<vmem>>, %arg8: memref<1x128x192xbf16, #tpu.memory_space<vmem>>, %arg9: memref<1x128x128xbf16, #tpu.memory_space<vmem>>, %arg10: memref<1x1x128xf32, #tpu.memory_space<vmem>>, %arg11: memref<1x128x256xbf16, #tpu.memory_space<vmem>>, %arg12: memref<1x128x256xbf16, #tpu.memory_space<vmem>>, %arg13: memref<1x256x128xbf16, #tpu.memory_space<vmem>>, %arg14: memref<1x128xf32, #tpu.memory_space<vmem>>, %arg15: memref<1x128xf32, #tpu.memory_space<vmem>>, %arg16: memref<1x1x128xf32, #tpu.memory_space<vmem>>, %arg17: memref<8x128xf32, #tpu.memory_space<vmem>>, %arg18: memref<8x128xf32, #tpu.memory_space<vmem>>) attributes {dimension_semantics = [#tpu.dimension_semantics<parallel>, #tpu.dimension_semantics<arbitrary>], iteration_bounds = array<i64: 2, 2>, scalar_prefetch = 1 : i64, scratch_operands = 2 : i64, tpu.core_type = #tpu.core_type<tc>, window_params = [{transform_indices = @transform_0, window_bounds = array<i64: 1, 8, 128>}, {pipeline_mode = #tpu.pipeline_mode<synchronous>, transform_indices = @transform_1, window_bounds = array<i64: 8, 128>}, {pipeline_mode = #tpu.pipeline_mode<synchronous>, transform_indices = @transform_2, window_bounds = array<i64: 8, 128>}, {transform_indices = @transform_3, window_bounds = array<i64: 1, 1, 128>}, {transform_indices = @transform_4, window_bounds = array<i64: 1, 128, 256>}, {transform_indices = @transform_5, window_bounds = array<i64: 1, 128, 192>}, {transform_indices = @transform_6, window_bounds = array<i64: 1, 128, 128>}, {transform_indices = @transform_7, window_bounds = array<i64: 1, 1, 128>}, {transform_indices = @transform_8, window_bounds = array<i64: 1, 128, 256>}, {transform_indices = @transform_9, window_bounds = array<i64: 1, 128, 256>}, {transform_indices = @transform_10, window_bounds = array<i64: 1, 256, 128>}, {pipeline_mode = #tpu.pipeline_mode<synchronous>, transform_indices = @transform_11, window_bounds = array<i64: 1, 128>}, {pipeline_mode = #tpu.pipeline_mode<synchronous>, transform_indices = @transform_12, window_bounds = array<i64: 1, 128>}, {transform_indices = @transform_13, window_bounds = array<i64: 1, 1, 128>}]} {
    %c0_i32 = arith.constant 0 : i32
    %0 = arith.cmpi eq, %arg1, %c0_i32 : i32
    %1 = arith.extui %0 : i1 to i32
    %c0_i32_0 = arith.constant 0 : i32
    %2 = arith.cmpi ne, %1, %c0_i32_0 : i32
    scf.if %2 {
      %c0_73 = arith.constant 0 : index
      %c0_74 = arith.constant 0 : index
      %c0_75 = arith.constant 0 : index
      %163 = vector.load %arg3[%c0_73, %c0_74, %c0_75] : memref<1x8x128xbf16, #tpu.memory_space<vmem>>, vector<1x8x128xbf16>
      %164 = vector.shape_cast %163 : vector<1x8x128xbf16> to vector<8x128xbf16>
      %165 = arith.extf %164 : vector<8x128xbf16> to vector<8x128xf32>
      %c0_76 = arith.constant 0 : index
      %c0_77 = arith.constant 0 : index
      %166 = vector.load %arg17[%c0_76, %c0_77] : memref<8x128xf32, #tpu.memory_space<vmem>>, vector<8x128xf32>
      tpu.vector_store %arg17[%c0_76, %c0_77], %165 {strides = array<i32>} : memref<8x128xf32, #tpu.memory_space<vmem>>, vector<8x128xf32>,
    } else {
    }
    %c0 = arith.constant 0 : index
    %c0_1 = arith.constant 0 : index
    %3 = vector.load %arg17[%c0, %c0_1] : memref<8x128xf32, #tpu.memory_space<vmem>>, vector<8x128xf32>
    %c0_2 = arith.constant 0 : index
    %c0_3 = arith.constant 0 : index
    %4 = vector.load %arg4[%c0_2, %c0_3] : memref<8x128xf32, #tpu.memory_space<vmem>>, vector<8x128xf32>
    %c0_4 = arith.constant 0 : index
    %c0_5 = arith.constant 0 : index
    %5 = vector.load %arg5[%c0_4, %c0_5] : memref<8x128xf32, #tpu.memory_space<vmem>>, vector<8x128xf32>
    %6 = arith.mulf %3, %3 : vector<8x128xf32>
    %cst = arith.constant dense<0.000000e+00> : vector<8xf32>
    %7 = vector.multi_reduction <add>, %6, %cst [1] : vector<8x128xf32> to vector<8xf32>
    %8 = vector.shape_cast %7 : vector<8xf32> to vector<8x1xf32>
    %cst_6 = arith.constant 1.280000e+02 : f32
    %9 = vector.broadcast %cst_6 : f32 to vector<8x1xf32>
    %10 = arith.divf %8, %9 : vector<8x1xf32>
    %cst_7 = arith.constant 9.99999997E-7 : f32
    %11 = vector.broadcast %cst_7 : f32 to vector<8x1xf32>
    %12 = arith.addf %10, %11 : vector<8x1xf32>
    %13 = math.rsqrt %12 : vector<8x1xf32>
    %14 = vector.broadcast %13 : vector<8x1xf32> to vector<8x128xf32>
    %15 = arith.mulf %3, %14 : vector<8x128xf32>
    %c0_8 = arith.constant 0 : index
    %c0_9 = arith.constant 0 : index
    %c0_10 = arith.constant 0 : index
    %16 = vector.load %arg6[%c0_8, %c0_9, %c0_10] : memref<1x1x128xf32, #tpu.memory_space<vmem>>, vector<1x1x128xf32>
    %17 = vector.shape_cast %16 : vector<1x1x128xf32> to vector<1x128xf32>
    %18 = vector.broadcast %17 : vector<1x128xf32> to vector<8x128xf32>
    %19 = arith.mulf %15, %18 : vector<8x128xf32>
    %20 = arith.truncf %19 : vector<8x128xf32> to vector<8x128xbf16>
    %c0_11 = arith.constant 0 : index
    %c0_12 = arith.constant 0 : index
    %c0_13 = arith.constant 0 : index
    %21 = vector.load %arg7[%c0_11, %c0_12, %c0_13] : memref<1x128x256xbf16, #tpu.memory_space<vmem>>, vector<1x128x256xbf16>
    %22 = vector.shape_cast %21 : vector<1x128x256xbf16> to vector<128x256xbf16>
    %cst_14 = arith.constant dense<0.000000e+00> : vector<8x256xf32>
    %23 = tpu.matmul %20, %22, %cst_14 {dimension_numbers = #tpu.dot_dimension_numbers<[1], [0], [0], [1], [0, 0, 1, 1], [], []>} : vector<8x128xbf16>, vector<128x256xbf16>, vector<8x256xf32> -> vector<8x256xf32>
    %c0_15 = arith.constant 0 : index
    %c0_16 = arith.constant 0 : index
    %c0_17 = arith.constant 0 : index
    %24 = vector.load %arg8[%c0_15, %c0_16, %c0_17] : memref<1x128x192xbf16, #tpu.memory_space<vmem>>, vector<1x128x192xbf16>
    %25 = vector.shape_cast %24 : vector<1x128x192xbf16> to vector<128x192xbf16>
    %cst_18 = arith.constant dense<0.000000e+00> : vector<8x192xf32>
    %26 = tpu.matmul %20, %25, %cst_18 {dimension_numbers = #tpu.dot_dimension_numbers<[1], [0], [0], [1], [0, 0, 1, 1], [], []>} : vector<8x128xbf16>, vector<128x192xbf16>, vector<8x192xf32> -> vector<8x192xf32>
    %27 = vector.extract_strided_slice %23 {offsets = [0, 0], sizes = [8, 128], strides = [1, 1]} : vector<8x256xf32> to vector<8x128xf32>
    %28 = vector.extract_strided_slice %23 {offsets = [0, 128], sizes = [8, 64], strides = [1, 1]} : vector<8x256xf32> to vector<8x64xf32>
    %29 = vector.extract_strided_slice %23 {offsets = [0, 192], sizes = [8, 64], strides = [1, 1]} : vector<8x256xf32> to vector<8x64xf32>
    %30 = vector.extract_strided_slice %26 {offsets = [0, 0], sizes = [8, 128], strides = [1, 1]} : vector<8x192xf32> to vector<8x128xf32>
    %31 = vector.extract_strided_slice %26 {offsets = [0, 128], sizes = [8, 64], strides = [1, 1]} : vector<8x192xf32> to vector<8x64xf32>
    %32 = arith.mulf %27, %4 : vector<8x128xf32>
    %33 = arith.mulf %30, %5 : vector<8x128xf32>
    %34 = arith.addf %32, %33 : vector<8x128xf32>
    %cst_19 = arith.constant 0.176776692 : f32
    %35 = vector.broadcast %cst_19 : f32 to vector<8x128xf32>
    %36 = arith.mulf %34, %35 : vector<8x128xf32>
    %37 = vector.extract_strided_slice %4 {offsets = [0, 0], sizes = [8, 64], strides = [1, 1]} : vector<8x128xf32> to vector<8x64xf32>
    %38 = arith.mulf %28, %37 : vector<8x64xf32>
    %39 = vector.extract_strided_slice %5 {offsets = [0, 0], sizes = [8, 64], strides = [1, 1]} : vector<8x128xf32> to vector<8x64xf32>
    %40 = arith.mulf %31, %39 : vector<8x64xf32>
    %41 = arith.addf %38, %40 : vector<8x64xf32>
    %42 = arith.truncf %36 : vector<8x128xf32> to vector<8x128xbf16>
    %43 = arith.truncf %41 : vector<8x64xf32> to vector<8x64xbf16>
    %44 = arith.truncf %29 : vector<8x64xf32> to vector<8x64xbf16>
    %45 = tpu.iota {dimensions = array<i32: 0>} : vector<8x8xi32>
    %46 = tpu.iota {dimensions = array<i32: 1>} : vector<8x8xi32>
    %47 = arith.cmpi sle, %46, %45 : vector<8x8xi32>
    %48 = vector.extract_strided_slice %42 {offsets = [0, 0], sizes = [8, 32], strides = [1, 1]} : vector<8x128xbf16> to vector<8x32xbf16>
    %49 = vector.extract_strided_slice %43 {offsets = [0, 0], sizes = [8, 32], strides = [1, 1]} : vector<8x64xbf16> to vector<8x32xbf16>
    %50 = vector.extract_strided_slice %44 {offsets = [0, 0], sizes = [8, 32], strides = [1, 1]} : vector<8x64xbf16> to vector<8x32xbf16>
    %cst_20 = arith.constant dense<0.000000e+00> : vector<8x8xf32>
    %51 = tpu.matmul %48, %49, %cst_20 {dimension_numbers = #tpu.dot_dimension_numbers<[1], [1], [0], [0], [0, 0, 1, 0], [], []>} : vector<8x32xbf16>, vector<8x32xbf16>, vector<8x8xf32> -> vector<8x8xf32>
    %cst_21 = arith.constant -1.000000e+30 : f32
    %52 = vector.broadcast %cst_21 : f32 to vector<8x8xf32>
    %53 = arith.select %47, %51, %52 : vector<8x8xi1>, vector<8x8xf32>
    %cst_22 = arith.constant dense<0xFF800000> : vector<8xf32>
    %54 = vector.multi_reduction <maximumf>, %53, %cst_22 [1] : vector<8x8xf32> to vector<8xf32>
    %55 = vector.shape_cast %54 : vector<8xf32> to vector<8x1xf32>
    %56 = vector.broadcast %55 : vector<8x1xf32> to vector<8x8xf32>
    %57 = arith.subf %53, %56 : vector<8x8xf32>
    %58 = math.exp %57 : vector<8x8xf32>
    %cst_23 = arith.constant dense<0.000000e+00> : vector<8xf32>
    %59 = vector.multi_reduction <add>, %58, %cst_23 [1] : vector<8x8xf32> to vector<8xf32>
    %60 = vector.shape_cast %59 : vector<8xf32> to vector<8x1xf32>
    %61 = arith.truncf %58 : vector<8x8xf32> to vector<8x8xbf16>
    %cst_24 = arith.constant dense<0.000000e+00> : vector<8x32xf32>
    %62 = tpu.matmul %61, %50, %cst_24 {dimension_numbers = #tpu.dot_dimension_numbers<[1], [0], [0], [1], [0, 0, 1, 1], [], []>} : vector<8x8xbf16>, vector<8x32xbf16>, vector<8x32xf32> -> vector<8x32xf32>
    %63 = vector.broadcast %60 : vector<8x1xf32> to vector<8x32xf32>
    %64 = arith.divf %62, %63 : vector<8x32xf32>
    %c0_25 = arith.constant 0 : index
    %c0_26 = arith.constant 0 : index
    %65 = vector.load %arg18[%c0_25, %c0_26] : memref<8x128xf32, #tpu.memory_space<vmem>>, vector<8x32xf32>
    tpu.vector_store %arg18[%c0_25, %c0_26], %64 {strides = array<i32>} : memref<8x128xf32, #tpu.memory_space<vmem>>, vector<8x32xf32>,
    %66 = vector.extract_strided_slice %42 {offsets = [0, 32], sizes = [8, 32], strides = [1, 1]} : vector<8x128xbf16> to vector<8x32xbf16>
    %67 = vector.extract_strided_slice %43 {offsets = [0, 0], sizes = [8, 32], strides = [1, 1]} : vector<8x64xbf16> to vector<8x32xbf16>
    %68 = vector.extract_strided_slice %44 {offsets = [0, 0], sizes = [8, 32], strides = [1, 1]} : vector<8x64xbf16> to vector<8x32xbf16>
    %cst_27 = arith.constant dense<0.000000e+00> : vector<8x8xf32>
    %69 = tpu.matmul %66, %67, %cst_27 {dimension_numbers = #tpu.dot_dimension_numbers<[1], [1], [0], [0], [0, 0, 1, 0], [], []>} : vector<8x32xbf16>, vector<8x32xbf16>, vector<8x8xf32> -> vector<8x8xf32>
    %cst_28 = arith.constant -1.000000e+30 : f32
    %70 = vector.broadcast %cst_28 : f32 to vector<8x8xf32>
    %71 = arith.select %47, %69, %70 : vector<8x8xi1>, vector<8x8xf32>
    %cst_29 = arith.constant dense<0xFF800000> : vector<8xf32>
    %72 = vector.multi_reduction <maximumf>, %71, %cst_29 [1] : vector<8x8xf32> to vector<8xf32>
    %73 = vector.shape_cast %72 : vector<8xf32> to vector<8x1xf32>
    %74 = vector.broadcast %73 : vector<8x1xf32> to vector<8x8xf32>
    %75 = arith.subf %71, %74 : vector<8x8xf32>
    %76 = math.exp %75 : vector<8x8xf32>
    %cst_30 = arith.constant dense<0.000000e+00> : vector<8xf32>
    %77 = vector.multi_reduction <add>, %76, %cst_30 [1] : vector<8x8xf32> to vector<8xf32>
    %78 = vector.shape_cast %77 : vector<8xf32> to vector<8x1xf32>
    %79 = arith.truncf %76 : vector<8x8xf32> to vector<8x8xbf16>
    %cst_31 = arith.constant dense<0.000000e+00> : vector<8x32xf32>
    %80 = tpu.matmul %79, %68, %cst_31 {dimension_numbers = #tpu.dot_dimension_numbers<[1], [0], [0], [1], [0, 0, 1, 1], [], []>} : vector<8x8xbf16>, vector<8x32xbf16>, vector<8x32xf32> -> vector<8x32xf32>
    %81 = vector.broadcast %78 : vector<8x1xf32> to vector<8x32xf32>
    %82 = arith.divf %80, %81 : vector<8x32xf32>
    %c0_32 = arith.constant 0 : index
    %c32 = arith.constant 32 : index
    %83 = vector.load %arg18[%c0_32, %c32] : memref<8x128xf32, #tpu.memory_space<vmem>>, vector<8x32xf32>
    tpu.vector_store %arg18[%c0_32, %c32], %82 {strides = array<i32>} : memref<8x128xf32, #tpu.memory_space<vmem>>, vector<8x32xf32>,
    %84 = vector.extract_strided_slice %42 {offsets = [0, 64], sizes = [8, 32], strides = [1, 1]} : vector<8x128xbf16> to vector<8x32xbf16>
    %85 = vector.extract_strided_slice %43 {offsets = [0, 32], sizes = [8, 32], strides = [1, 1]} : vector<8x64xbf16> to vector<8x32xbf16>
    %86 = vector.extract_strided_slice %44 {offsets = [0, 32], sizes = [8, 32], strides = [1, 1]} : vector<8x64xbf16> to vector<8x32xbf16>
    %cst_33 = arith.constant dense<0.000000e+00> : vector<8x8xf32>
    %87 = tpu.matmul %84, %85, %cst_33 {dimension_numbers = #tpu.dot_dimension_numbers<[1], [1], [0], [0], [0, 0, 1, 0], [], []>} : vector<8x32xbf16>, vector<8x32xbf16>, vector<8x8xf32> -> vector<8x8xf32>
    %cst_34 = arith.constant -1.000000e+30 : f32
    %88 = vector.broadcast %cst_34 : f32 to vector<8x8xf32>
    %89 = arith.select %47, %87, %88 : vector<8x8xi1>, vector<8x8xf32>
    %cst_35 = arith.constant dense<0xFF800000> : vector<8xf32>
    %90 = vector.multi_reduction <maximumf>, %89, %cst_35 [1] : vector<8x8xf32> to vector<8xf32>
    %91 = vector.shape_cast %90 : vector<8xf32> to vector<8x1xf32>
    %92 = vector.broadcast %91 : vector<8x1xf32> to vector<8x8xf32>
    %93 = arith.subf %89, %92 : vector<8x8xf32>
    %94 = math.exp %93 : vector<8x8xf32>
    %cst_36 = arith.constant dense<0.000000e+00> : vector<8xf32>
    %95 = vector.multi_reduction <add>, %94, %cst_36 [1] : vector<8x8xf32> to vector<8xf32>
    %96 = vector.shape_cast %95 : vector<8xf32> to vector<8x1xf32>
    %97 = arith.truncf %94 : vector<8x8xf32> to vector<8x8xbf16>
    %cst_37 = arith.constant dense<0.000000e+00> : vector<8x32xf32>
    %98 = tpu.matmul %97, %86, %cst_37 {dimension_numbers = #tpu.dot_dimension_numbers<[1], [0], [0], [1], [0, 0, 1, 1], [], []>} : vector<8x8xbf16>, vector<8x32xbf16>, vector<8x32xf32> -> vector<8x32xf32>
    %99 = vector.broadcast %96 : vector<8x1xf32> to vector<8x32xf32>
    %100 = arith.divf %98, %99 : vector<8x32xf32>
    %c0_38 = arith.constant 0 : index
    %c64 = arith.constant 64 : index
    %101 = vector.load %arg18[%c0_38, %c64] : memref<8x128xf32, #tpu.memory_space<vmem>>, vector<8x32xf32>
    tpu.vector_store %arg18[%c0_38, %c64], %100 {strides = array<i32>} : memref<8x128xf32, #tpu.memory_space<vmem>>, vector<8x32xf32>,
    %102 = vector.extract_strided_slice %42 {offsets = [0, 96], sizes = [8, 32], strides = [1, 1]} : vector<8x128xbf16> to vector<8x32xbf16>
    %103 = vector.extract_strided_slice %43 {offsets = [0, 32], sizes = [8, 32], strides = [1, 1]} : vector<8x64xbf16> to vector<8x32xbf16>
    %104 = vector.extract_strided_slice %44 {offsets = [0, 32], sizes = [8, 32], strides = [1, 1]} : vector<8x64xbf16> to vector<8x32xbf16>
    %cst_39 = arith.constant dense<0.000000e+00> : vector<8x8xf32>
    %105 = tpu.matmul %102, %103, %cst_39 {dimension_numbers = #tpu.dot_dimension_numbers<[1], [1], [0], [0], [0, 0, 1, 0], [], []>} : vector<8x32xbf16>, vector<8x32xbf16>, vector<8x8xf32> -> vector<8x8xf32>
    %cst_40 = arith.constant -1.000000e+30 : f32
    %106 = vector.broadcast %cst_40 : f32 to vector<8x8xf32>
    %107 = arith.select %47, %105, %106 : vector<8x8xi1>, vector<8x8xf32>
    %cst_41 = arith.constant dense<0xFF800000> : vector<8xf32>
    %108 = vector.multi_reduction <maximumf>, %107, %cst_41 [1] : vector<8x8xf32> to vector<8xf32>
    %109 = vector.shape_cast %108 : vector<8xf32> to vector<8x1xf32>
    %110 = vector.broadcast %109 : vector<8x1xf32> to vector<8x8xf32>
    %111 = arith.subf %107, %110 : vector<8x8xf32>
    %112 = math.exp %111 : vector<8x8xf32>
    %cst_42 = arith.constant dense<0.000000e+00> : vector<8xf32>
    %113 = vector.multi_reduction <add>, %112, %cst_42 [1] : vector<8x8xf32> to vector<8xf32>
    %114 = vector.shape_cast %113 : vector<8xf32> to vector<8x1xf32>
    %115 = arith.truncf %112 : vector<8x8xf32> to vector<8x8xbf16>
    %cst_43 = arith.constant dense<0.000000e+00> : vector<8x32xf32>
    %116 = tpu.matmul %115, %104, %cst_43 {dimension_numbers = #tpu.dot_dimension_numbers<[1], [0], [0], [1], [0, 0, 1, 1], [], []>} : vector<8x8xbf16>, vector<8x32xbf16>, vector<8x32xf32> -> vector<8x32xf32>
    %117 = vector.broadcast %114 : vector<8x1xf32> to vector<8x32xf32>
    %118 = arith.divf %116, %117 : vector<8x32xf32>
    %c0_44 = arith.constant 0 : index
    %c96 = arith.constant 96 : index
    %119 = vector.load %arg18[%c0_44, %c96] : memref<8x128xf32, #tpu.memory_space<vmem>>, vector<8x32xf32>
    tpu.vector_store %arg18[%c0_44, %c96], %118 {strides = array<i32>} : memref<8x128xf32, #tpu.memory_space<vmem>>, vector<8x32xf32>,
    %c0_45 = arith.constant 0 : index
    %c0_46 = arith.constant 0 : index
    %120 = vector.load %arg18[%c0_45, %c0_46] : memref<8x128xf32, #tpu.memory_space<vmem>>, vector<8x128xf32>
    %121 = arith.truncf %120 : vector<8x128xf32> to vector<8x128xbf16>
    %c0_47 = arith.constant 0 : index
    %c0_48 = arith.constant 0 : index
    %c0_49 = arith.constant 0 : index
    %122 = vector.load %arg9[%c0_47, %c0_48, %c0_49] : memref<1x128x128xbf16, #tpu.memory_space<vmem>>, vector<1x128x128xbf16>
    %123 = vector.shape_cast %122 : vector<1x128x128xbf16> to vector<128x128xbf16>
    %cst_50 = arith.constant dense<0.000000e+00> : vector<8x128xf32>
    %124 = tpu.matmul %121, %123, %cst_50 {dimension_numbers = #tpu.dot_dimension_numbers<[1], [0], [0], [1], [0, 0, 1, 1], [], []>} : vector<8x128xbf16>, vector<128x128xbf16>, vector<8x128xf32> -> vector<8x128xf32>
    %125 = arith.addf %3, %124 : vector<8x128xf32>
    %126 = arith.mulf %125, %125 : vector<8x128xf32>
    %cst_51 = arith.constant dense<0.000000e+00> : vector<8xf32>
    %127 = vector.multi_reduction <add>, %126, %cst_51 [1] : vector<8x128xf32> to vector<8xf32>
    %128 = vector.shape_cast %127 : vector<8xf32> to vector<8x1xf32>
    %cst_52 = arith.constant 1.280000e+02 : f32
    %129 = vector.broadcast %cst_52 : f32 to vector<8x1xf32>
    %130 = arith.divf %128, %129 : vector<8x1xf32>
    %cst_53 = arith.constant 9.99999997E-7 : f32
    %131 = vector.broadcast %cst_53 : f32 to vector<8x1xf32>
    %132 = arith.addf %130, %131 : vector<8x1xf32>
    %133 = math.rsqrt %132 : vector<8x1xf32>
    %134 = vector.broadcast %133 : vector<8x1xf32> to vector<8x128xf32>
    %135 = arith.mulf %125, %134 : vector<8x128xf32>
    %c0_54 = arith.constant 0 : index
    %c0_55 = arith.constant 0 : index
    %c0_56 = arith.constant 0 : index
    %136 = vector.load %arg10[%c0_54, %c0_55, %c0_56] : memref<1x1x128xf32, #tpu.memory_space<vmem>>, vector<1x1x128xf32>
    %137 = vector.shape_cast %136 : vector<1x1x128xf32> to vector<1x128xf32>
    %138 = vector.broadcast %137 : vector<1x128xf32> to vector<8x128xf32>
    %139 = arith.mulf %135, %138 : vector<8x128xf32>
    %140 = arith.truncf %139 : vector<8x128xf32> to vector<8x128xbf16>
    %c0_57 = arith.constant 0 : index
    %c0_58 = arith.constant 0 : index
    %c0_59 = arith.constant 0 : index
    %141 = vector.load %arg11[%c0_57, %c0_58, %c0_59] : memref<1x128x256xbf16, #tpu.memory_space<vmem>>, vector<1x128x256xbf16>
    %142 = vector.shape_cast %141 : vector<1x128x256xbf16> to vector<128x256xbf16>
    %cst_60 = arith.constant dense<0.000000e+00> : vector<8x256xf32>
    %143 = tpu.matmul %140, %142, %cst_60 {dimension_numbers = #tpu.dot_dimension_numbers<[1], [0], [0], [1], [0, 0, 1, 1], [], []>} : vector<8x128xbf16>, vector<128x256xbf16>, vector<8x256xf32> -> vector<8x256xf32>
    %c0_61 = arith.constant 0 : index
    %c0_62 = arith.constant 0 : index
    %c0_63 = arith.constant 0 : index
    %144 = vector.load %arg12[%c0_61, %c0_62, %c0_63] : memref<1x128x256xbf16, #tpu.memory_space<vmem>>, vector<1x128x256xbf16>
    %145 = vector.shape_cast %144 : vector<1x128x256xbf16> to vector<128x256xbf16>
    %cst_64 = arith.constant dense<0.000000e+00> : vector<8x256xf32>
    %146 = tpu.matmul %140, %145, %cst_64 {dimension_numbers = #tpu.dot_dimension_numbers<[1], [0], [0], [1], [0, 0, 1, 1], [], []>} : vector<8x128xbf16>, vector<128x256xbf16>, vector<8x256xf32> -> vector<8x256xf32>
    %147 = arith.negf %143 : vector<8x256xf32>
    %148 = math.exp %147 : vector<8x256xf32>
    %cst_65 = arith.constant 1.000000e+00 : f32
    %149 = vector.broadcast %cst_65 : f32 to vector<8x256xf32>
    %150 = arith.addf %149, %148 : vector<8x256xf32>
    %151 = arith.divf %149, %150 : vector<8x256xf32>
    %152 = arith.mulf %143, %151 : vector<8x256xf32>
    %153 = arith.mulf %152, %146 : vector<8x256xf32>
    %154 = arith.truncf %153 : vector<8x256xf32> to vector<8x256xbf16>
    %c0_66 = arith.constant 0 : index
    %c0_67 = arith.constant 0 : index
    %c0_68 = arith.constant 0 : index
    %155 = vector.load %arg13[%c0_66, %c0_67, %c0_68] : memref<1x256x128xbf16, #tpu.memory_space<vmem>>, vector<1x256x128xbf16>
    %156 = vector.shape_cast %155 : vector<1x256x128xbf16> to vector<256x128xbf16>
    %cst_69 = arith.constant dense<0.000000e+00> : vector<8x128xf32>
    %157 = tpu.matmul %154, %156, %cst_69 {dimension_numbers = #tpu.dot_dimension_numbers<[1], [0], [0], [1], [0, 0, 1, 1], [], []>} : vector<8x256xbf16>, vector<256x128xbf16>, vector<8x128xf32> -> vector<8x128xf32>
    %158 = arith.addf %125, %157 : vector<8x128xf32>
    %c0_70 = arith.constant 0 : index
    %c0_71 = arith.constant 0 : index
    %159 = vector.load %arg17[%c0_70, %c0_71] : memref<8x128xf32, #tpu.memory_space<vmem>>, vector<8x128xf32>
    tpu.vector_store %arg17[%c0_70, %c0_71], %158 {strides = array<i32>} : memref<8x128xf32, #tpu.memory_space<vmem>>, vector<8x128xf32>,
    %c1_i32 = arith.constant 1 : i32
    %160 = arith.cmpi eq, %arg1, %c1_i32 : i32
    %161 = arith.extui %160 : i1 to i32
    %c0_i32_72 = arith.constant 0 : i32
    %162 = arith.cmpi ne, %161, %c0_i32_72 : i32
    scf.if %162 {
      %163 = arith.index_cast %arg0 : i32 to index
      %164 = memref.load %arg2[%163] : memref<2xi32, #tpu.memory_space<smem>>
      %c1_i32_73 = arith.constant 1 : i32
      %165 = arith.subi %164, %c1_i32_73 : i32
      %c0_i32_74 = arith.constant 0 : i32
      %166 = arith.maxsi %165, %c0_i32_74 : i32
      %167 = arith.index_cast %166 : i32 to index
      %c0_75 = arith.constant 0 : index
      %168 = vector.load %arg17[%167, %c0_75] : memref<8x128xf32, #tpu.memory_space<vmem>>, vector<1x128xf32>
      %169 = arith.mulf %168, %168 : vector<1x128xf32>
      %cst_76 = arith.constant dense<0.000000e+00> : vector<1xf32>
      %170 = vector.multi_reduction <add>, %169, %cst_76 [1] : vector<1x128xf32> to vector<1xf32>
      %171 = vector.shape_cast %170 : vector<1xf32> to vector<1x1xf32>
      %cst_77 = arith.constant 1.280000e+02 : f32
      %172 = vector.broadcast %cst_77 : f32 to vector<1x1xf32>
      %173 = arith.divf %171, %172 : vector<1x1xf32>
      %cst_78 = arith.constant 9.99999997E-7 : f32
      %174 = vector.broadcast %cst_78 : f32 to vector<1x1xf32>
      %175 = arith.addf %173, %174 : vector<1x1xf32>
      %176 = math.rsqrt %175 : vector<1x1xf32>
      %177 = vector.broadcast %176 : vector<1x1xf32> to vector<1x128xf32>
      %178 = arith.mulf %168, %177 : vector<1x128xf32>
      %c0_79 = arith.constant 0 : index
      %c0_80 = arith.constant 0 : index
      %179 = vector.load %arg14[%c0_79, %c0_80] : memref<1x128xf32, #tpu.memory_space<vmem>>, vector<1x128xf32>
      %180 = arith.mulf %178, %179 : vector<1x128xf32>
      %c0_81 = arith.constant 0 : index
      %c0_82 = arith.constant 0 : index
      %181 = vector.load %arg15[%c0_81, %c0_82] : memref<1x128xf32, #tpu.memory_space<vmem>>, vector<1x128xf32>
      %182 = arith.mulf %180, %181 : vector<1x128xf32>
      %cst_83 = arith.constant dense<0.000000e+00> : vector<1xf32>
      %183 = vector.multi_reduction <add>, %182, %cst_83 [1] : vector<1x128xf32> to vector<1xf32>
      %184 = vector.shape_cast %183 : vector<1xf32> to vector<1x1xf32>
      %185 = vector.shape_cast %184 : vector<1x1xf32> to vector<1x1xf32>
      %186 = vector.broadcast %185 : vector<1x1xf32> to vector<1x128xf32>
      %c0_84 = arith.constant 0 : index
      %c0_85 = arith.constant 0 : index
      %c0_86 = arith.constant 0 : index
      %187 = vector.load %arg16[%c0_84, %c0_85, %c0_86] : memref<1x1x128xf32, #tpu.memory_space<vmem>>, vector<1x1x128xf32>
      %188 = vector.shape_cast %187 : vector<1x1x128xf32> to vector<1x128xf32>
      %189 = vector.shape_cast %186 : vector<1x128xf32> to vector<1x1x128xf32>
      tpu.vector_store %arg16[%c0_84, %c0_85, %c0_86], %189 {strides = array<i32>} : memref<1x1x128xf32, #tpu.memory_space<vmem>>, vector<1x1x128xf32>,
    } else {
    }
    return
  }
  func.func @transform_0(%arg0: i32, %arg1: i32, %arg2: memref<2xi32, #tpu.memory_space<smem>>) -> (i32, i32, i32) {
    %c0_i32 = arith.constant 0 : i32
    %c0_i32_0 = arith.constant 0 : i32
    %c0_i32_1 = arith.constant 0 : i32
    return %arg0, %c0_i32, %c0_i32_0 : i32, i32, i32
  }
  func.func @transform_1(%arg0: i32, %arg1: i32, %arg2: memref<2xi32, #tpu.memory_space<smem>>) -> (i32, i32) {
    %c0_i32 = arith.constant 0 : i32
    %c0_i32_0 = arith.constant 0 : i32
    %c0_i32_1 = arith.constant 0 : i32
    return %c0_i32, %c0_i32_0 : i32, i32
  }
  func.func @transform_2(%arg0: i32, %arg1: i32, %arg2: memref<2xi32, #tpu.memory_space<smem>>) -> (i32, i32) {
    %c0_i32 = arith.constant 0 : i32
    %c0_i32_0 = arith.constant 0 : i32
    %c0_i32_1 = arith.constant 0 : i32
    return %c0_i32, %c0_i32_0 : i32, i32
  }
  func.func @transform_3(%arg0: i32, %arg1: i32, %arg2: memref<2xi32, #tpu.memory_space<smem>>) -> (i32, i32, i32) {
    %c0_i32 = arith.constant 0 : i32
    %c0_i32_0 = arith.constant 0 : i32
    %c0_i32_1 = arith.constant 0 : i32
    return %arg1, %c0_i32, %c0_i32_0 : i32, i32, i32
  }
  func.func @transform_4(%arg0: i32, %arg1: i32, %arg2: memref<2xi32, #tpu.memory_space<smem>>) -> (i32, i32, i32) {
    %c0_i32 = arith.constant 0 : i32
    %c0_i32_0 = arith.constant 0 : i32
    %c0_i32_1 = arith.constant 0 : i32
    return %arg1, %c0_i32, %c0_i32_0 : i32, i32, i32
  }
  func.func @transform_5(%arg0: i32, %arg1: i32, %arg2: memref<2xi32, #tpu.memory_space<smem>>) -> (i32, i32, i32) {
    %c0_i32 = arith.constant 0 : i32
    %c0_i32_0 = arith.constant 0 : i32
    %c0_i32_1 = arith.constant 0 : i32
    return %arg1, %c0_i32, %c0_i32_0 : i32, i32, i32
  }
  func.func @transform_6(%arg0: i32, %arg1: i32, %arg2: memref<2xi32, #tpu.memory_space<smem>>) -> (i32, i32, i32) {
    %c0_i32 = arith.constant 0 : i32
    %c0_i32_0 = arith.constant 0 : i32
    %c0_i32_1 = arith.constant 0 : i32
    return %arg1, %c0_i32, %c0_i32_0 : i32, i32, i32
  }
  func.func @transform_7(%arg0: i32, %arg1: i32, %arg2: memref<2xi32, #tpu.memory_space<smem>>) -> (i32, i32, i32) {
    %c0_i32 = arith.constant 0 : i32
    %c0_i32_0 = arith.constant 0 : i32
    %c0_i32_1 = arith.constant 0 : i32
    return %arg1, %c0_i32, %c0_i32_0 : i32, i32, i32
  }
  func.func @transform_8(%arg0: i32, %arg1: i32, %arg2: memref<2xi32, #tpu.memory_space<smem>>) -> (i32, i32, i32) {
    %c0_i32 = arith.constant 0 : i32
    %c0_i32_0 = arith.constant 0 : i32
    %c0_i32_1 = arith.constant 0 : i32
    return %arg1, %c0_i32, %c0_i32_0 : i32, i32, i32
  }
  func.func @transform_9(%arg0: i32, %arg1: i32, %arg2: memref<2xi32, #tpu.memory_space<smem>>) -> (i32, i32, i32) {
    %c0_i32 = arith.constant 0 : i32
    %c0_i32_0 = arith.constant 0 : i32
    %c0_i32_1 = arith.constant 0 : i32
    return %arg1, %c0_i32, %c0_i32_0 : i32, i32, i32
  }
  func.func @transform_10(%arg0: i32, %arg1: i32, %arg2: memref<2xi32, #tpu.memory_space<smem>>) -> (i32, i32, i32) {
    %c0_i32 = arith.constant 0 : i32
    %c0_i32_0 = arith.constant 0 : i32
    %c0_i32_1 = arith.constant 0 : i32
    return %arg1, %c0_i32, %c0_i32_0 : i32, i32, i32
  }
  func.func @transform_11(%arg0: i32, %arg1: i32, %arg2: memref<2xi32, #tpu.memory_space<smem>>) -> (i32, i32) {
    %c0_i32 = arith.constant 0 : i32
    %c0_i32_0 = arith.constant 0 : i32
    %c0_i32_1 = arith.constant 0 : i32
    return %c0_i32, %c0_i32_0 : i32, i32
  }
  func.func @transform_12(%arg0: i32, %arg1: i32, %arg2: memref<2xi32, #tpu.memory_space<smem>>) -> (i32, i32) {
    %c0_i32 = arith.constant 0 : i32
    %c0_i32_0 = arith.constant 0 : i32
    %c0_i32_1 = arith.constant 0 : i32
    return %c0_i32, %c0_i32_0 : i32, i32
  }
  func.func @transform_13(%arg0: i32, %arg1: i32, %arg2: memref<2xi32, #tpu.memory_space<smem>>) -> (i32, i32, i32) {
    %c0_i32 = arith.constant 0 : i32
    %c0_i32_0 = arith.constant 0 : i32
    %c0_i32_1 = arith.constant 0 : i32
    return %arg0, %c0_i32, %c0_i32_0 : i32, i32, i32
  }
}

</mosaic_0001>

<llo_original>
// kernel: forward.1
$region0: #{forward.1}
  #allocation0 [shape = 'u32[]', space=smem, size = 0x4, offset = 0x4, fixed_abs, tag = 'smem constant byte address 0x4 - core index']
  #allocation1 [shape = 'u32[144,128]{1,0:T(1,128)}', space=vmem, size = 0x12000, scoped, tag = 'internal scratch']
  #allocation2 [shape = 'f32[8,128]{1,0:T(8,128)}', space=vmem, size = 0x1000, scoped, tag = 'scratch operand']
  #allocation3 [shape = 'f32[8,128]{1,0:T(8,128)}', space=vmem, size = 0x1000, scoped, tag = 'scratch operand']
  #allocation4 [shape = 's32[1]{0}', space=sflag, size = 0x4, scoped, tag = 'scoped memory for forward.1']
  #allocation5 [shape = 'u8[512]{0}', space=smem, size = 0x200, scoped, tag = 'prefetched SMEM operand 0']
  %s0 = inlined_call_operand.vmem [shape: s32[2], index: 0, kind: input, shape index: {}]
  %s1 = inlined_call_operand.vmem [shape: bf16[2,8,128], index: 1, kind: input, shape index: {}]
  %s2 = inlined_call_operand.vmem [shape: f32[8,128], index: 2, kind: input, shape index: {}]
  %s3 = inlined_call_operand.vmem [shape: f32[8,128], index: 3, kind: input, shape index: {}]
  %s4 = inlined_call_operand.vmem [shape: f32[2,1,128], index: 4, kind: input, shape index: {}]
  %s5 = inlined_call_operand.vmem [shape: bf16[2,128,256], index: 5, kind: input, shape index: {}]
  %s6 = inlined_call_operand.vmem [shape: bf16[2,128,192], index: 6, kind: input, shape index: {}]
  %s7 = inlined_call_operand.hbm [shape: bf16[2,128,128], index: 7, kind: input, shape index: {}]
  %s8 = inlined_call_operand.vmem [shape: f32[2,1,128], index: 8, kind: input, shape index: {}]
  %s9 = inlined_call_operand.vmem [shape: bf16[2,128,256], index: 9, kind: input, shape index: {}]
  %s10 = inlined_call_operand.vmem [shape: bf16[2,128,256], index: 10, kind: input, shape index: {}]
  %s11 = inlined_call_operand.hbm [shape: bf16[2,256,128], index: 11, kind: input, shape index: {}]
  %s12 = inlined_call_operand.hbm [shape: f32[1,128], index: 12, kind: input, shape index: {}]
  %s13 = inlined_call_operand.vmem [shape: f32[1,128], index: 13, kind: input, shape index: {}]
  %s14 = inlined_call_operand.vmem [shape: f32[2,1,128], index: 14, kind: output, shape index: {}]
  %s15 = sld [smem:[#allocation0]]
  $region105: #{forward.1} parent=0
    _
  %s17 = ssub.s32 1, %s15
  %s18 = scalar_select 0, %s17, %s15
  %s19 = sshll.u32 %s0, 4
  %s20 = int_to_ptr.vmem [resolvable:$true] %s19
  %22 = dma.vmem_to_smem %s20, 16, [#allocation5], [#allocation4]
  %23 = dma.done [#allocation4], 16
  %24 = sfence
  $region1: #{forward.1} parent=0
    #allocation6 [shape = 'u8[65536]{0}', space=vmem, size = 0x10000, scoped, tag = 'input window, operand 7']
    #allocation7 [shape = 's32[2]{0}', space=sflag, size = 0x8, scoped, tag = 'scoped memory for forward.1']
    #allocation8 [shape = 'u8[131072]{0}', space=vmem, size = 0x20000, scoped, tag = 'input window, operand 11']
    #allocation9 [shape = 's32[2]{0}', space=sflag, size = 0x8, scoped, tag = 'scoped memory for forward.1']
    #allocation10 [shape = 'u8[512]{0}', space=vmem, size = 0x400, scoped, tag = 'input window, operand 12, single buffered']
    %25 = vsyncpa [#allocation7], 0
    %s26 = scalar_lea.sflag [#allocation7], 1
    %27 = vsyncpa %s26, 0
    %28 = vsyncpa [#allocation9], 0
    %s29 = scalar_lea.sflag [#allocation9], 1
    %30 = vsyncpa %s29, 0
    loop: start=0, step=1, limit=6
    $region2: #{forward.1} parent=1 // loop_pre_header
      _
    $region3: #{forward.1} parent=1 // loop_header
      %s32 = sphi 0, %s36
      %p33 = scmp.ge.s32.totalorder %s32, 6
      %s39 = sphi 0, %s51
      %s40 = sphi 0, %s47
      %s41 = sphi 0, %s39
      %s42 = sphi 0, %s40
      %s43 = sphi 0, %s41
      %s44 = sphi 0, %s42
      %s54 = sphi 0, %s56
      %s57 = sphi 0, %s54
      %s58 = sphi 0, %s57
      %s74 = sphi 0, %s58
      %s78 = sphi 0, %s78
      %s80 = sphi 0, %s78
      %s81 = sphi 0, %s80
      %s95 = sphi 0, %s81
      %s99 = sphi 0, %s99
      %s101 = sphi 0, %s99
      %s102 = sphi 0, %s101
      %s116 = sphi 0, %s102
      %s122 = sphi 0, %s124
      %s125 = sphi 0, %s122
      %s126 = sphi 0, %s125
      %s142 = sphi 0, %s126
      %s148 = sphi 0, %s150
      %s151 = sphi 0, %s148
      %s152 = sphi 0, %s151
      %s168 = sphi 0, %s152
      %s174 = sphi 0, %s176
      %s177 = sphi 0, %s174
      %s178 = sphi 0, %s177
      %s194 = sphi 0, %s178
      %s200 = sphi 0, %s202
      %s203 = sphi 0, %s200
      %s204 = sphi 0, %s203
      %s220 = sphi 0, %s204
      %s226 = sphi 0, %s228
      %s229 = sphi 0, %s226
      %s230 = sphi 0, %s229
      %s246 = sphi 0, %s230
      %s252 = sphi 0, %s254
      %s255 = sphi 0, %s252
      %s256 = sphi 0, %s255
      %s272 = sphi 0, %s256
      %s278 = sphi 0, %s280
      %s281 = sphi 0, %s278
      %s282 = sphi 0, %s281
      %s298 = sphi 0, %s282
      %s304 = sphi 0, %s306
      %s307 = sphi 0, %s304
      %s308 = sphi 0, %s307
      %s324 = sphi 0, %s308
      %s328 = sphi 0, %s328
      %s330 = sphi 0, %s328
      %s331 = sphi 0, %s330
      %s345 = sphi 0, %s331
      %s349 = sphi 0, %s349
      %s351 = sphi 0, %s349
      %s352 = sphi 0, %s351
      %s366 = sphi 0, %s352
      %s372 = sphi 0, %s374
      %s375 = sphi 0, %s372
      %s376 = sphi 0, %s375
      %s392 = sphi 0, %s376
    $region4: #{forward.1} parent=1 // loop_header_branch
      %35 = sbr.rel (%p33) target = $region8
    $region5: #{forward.1} parent=1 // loop_body
      %s37 = ssub.s32 %s32, 1
      %s38 = ssub.s32 %s32, 2
      %s45 = sadd.s32 1, %s40
      %p46 = scmp.ge.s32.totalorder %s45, 2
      %s47 = scalar_select %p46, 0, %s45
      %s48 = sadd.s32 1, %s39
      %s49 = scalar_select %p46, %s48, %s39
      %p50 = scmp.ge.s32.totalorder %s49, 2
      %s51 = scalar_select %p50, 0, %s49
      %s52 = ssub.s32 %s39, %s51
      %p53 = scmp.eq.s32.totalorder %s52, 0
      %s55 = sadd.s32 %s54, 1
      %s56 = scalar_select %p53, %s54, %s55
      %p59 = pneg %p53
      %p60 = scmp.eq.s32.totalorder %s32, 3
      %p61 = por %p59, %p60
      %p62 = scmp.ne.s32.totalorder %s54, %s57
      %p63 = scmp.eq.s32.totalorder %s32, 0
      %p64 = por %p62, %p63
      %p65 = scmp.ne.s32.totalorder %s54, %s57
      %p66 = scmp.eq.s32.totalorder %s37, 3
      %p67 = por %p65, %p66
      %p68 = scmp.ne.s32.totalorder %s57, %s58
      %p69 = scmp.eq.s32.totalorder %s37, 0
      %p70 = por %p68, %p69
      %p71 = scmp.ne.s32.totalorder %s57, %s58
      %p72 = scmp.eq.s32.totalorder %s38, 3
      %p73 = por %p71, %p72
      %p75 = scmp.ne.s32.totalorder %s58, %s74
      %p76 = scmp.eq.s32.totalorder %s38, 0
      %p77 = por %p75, %p76
      %s79 = sadd.s32 %s78, 1
      %p82 = scmp.eq.s32.totalorder %s32, 3
      %p83 = scmp.ne.s32.totalorder %s78, %s80
      %p84 = scmp.eq.s32.totalorder %s32, 0
      %p85 = por %p83, %p84
      %p86 = scmp.ne.s32.totalorder %s78, %s80
      %p87 = scmp.eq.s32.totalorder %s37, 3
      %p88 = por %p86, %p87
      %p89 = scmp.ne.s32.totalorder %s80, %s81
      %p90 = scmp.eq.s32.totalorder %s37, 0
      %p91 = por %p89, %p90
      %p92 = scmp.ne.s32.totalorder %s80, %s81
      %p93 = scmp.eq.s32.totalorder %s38, 3
      %p94 = por %p92, %p93
      %p96 = scmp.ne.s32.totalorder %s81, %s95
      %p97 = scmp.eq.s32.totalorder %s38, 0
      %p98 = por %p96, %p97
      %s100 = sadd.s32 %s99, 1
      %p103 = scmp.eq.s32.totalorder %s32, 3
      %p104 = scmp.ne.s32.totalorder %s99, %s101
      %p105 = scmp.eq.s32.totalorder %s32, 0
      %p106 = por %p104, %p105
      %p107 = scmp.ne.s32.totalorder %s99, %s101
      %p108 = scmp.eq.s32.totalorder %s37, 3
      %p109 = por %p107, %p108
      %p110 = scmp.ne.s32.totalorder %s101, %s102
      %p111 = scmp.eq.s32.totalorder %s37, 0
      %p112 = por %p110, %p111
      %p113 = scmp.ne.s32.totalorder %s101, %s102
      %p114 = scmp.eq.s32.totalorder %s38, 3
      %p115 = por %p113, %p114
      %p117 = scmp.ne.s32.totalorder %s102, %s116
      %p118 = scmp.eq.s32.totalorder %s38, 0
      %p119 = por %p117, %p118
      %s120 = ssub.s32 %s40, %s47
      %p121 = scmp.eq.s32.totalorder %s120, 0
      %s123 = sadd.s32 %s122, 1
      %s124 = scalar_select %p121, %s122, %s123
      %p127 = pneg %p121
      %p128 = scmp.eq.s32.totalorder %s32, 3
      %p129 = por %p127, %p128
      %p130 = scmp.ne.s32.totalorder %s122, %s125
      %p131 = scmp.eq.s32.totalorder %s32, 0
      %p132 = por %p130, %p131
      %p133 = scmp.ne.s32.totalorder %s122, %s125
      %p134 = scmp.eq.s32.totalorder %s37, 3
      %p135 = por %p133, %p134
      %p136 = scmp.ne.s32.totalorder %s125, %s126
      %p137 = scmp.eq.s32.totalorder %s37, 0
      %p138 = por %p136, %p137
      %p139 = scmp.ne.s32.totalorder %s125, %s126
      %p140 = scmp.eq.s32.totalorder %s38, 3
      %p141 = por %p139, %p140
      %p143 = scmp.ne.s32.totalorder %s126, %s142
      %p144 = scmp.eq.s32.totalorder %s38, 0
      %p145 = por %p143, %p144
      %s146 = ssub.s32 %s40, %s47
      %p147 = scmp.eq.s32.totalorder %s146, 0
      %s149 = sadd.s32 %s148, 1
      %s150 = scalar_select %p147, %s148, %s149
      %p153 = pneg %p147
      %p154 = scmp.eq.s32.totalorder %s32, 3
      %p155 = por %p153, %p154
      %p156 = scmp.ne.s32.totalorder %s148, %s151
      %p157 = scmp.eq.s32.totalorder %s32, 0
      %p158 = por %p156, %p157
      %p159 = scmp.ne.s32.totalorder %s148, %s151
      %p160 = scmp.eq.s32.totalorder %s37, 3
      %p161 = por %p159, %p160
      %p162 = scmp.ne.s32.totalorder %s151, %s152
      %p163 = scmp.eq.s32.totalorder %s37, 0
      %p164 = por %p162, %p163
      %p165 = scmp.ne.s32.totalorder %s151, %s152
      %p166 = scmp.eq.s32.totalorder %s38, 3
      %p167 = por %p165, %p166
      %p169 = scmp.ne.s32.totalorder %s152, %s168
      %p170 = scmp.eq.s32.totalorder %s38, 0
      %p171 = por %p169, %p170
      %s172 = ssub.s32 %s40, %s47
      %p173 = scmp.eq.s32.totalorder %s172, 0
      %s175 = sadd.s32 %s174, 1
      %s176 = scalar_select %p173, %s174, %s175
      %p179 = pneg %p173
      %p180 = scmp.eq.s32.totalorder %s32, 3
      %p181 = por %p179, %p180
      %p182 = scmp.ne.s32.totalorder %s174, %s177
      %p183 = scmp.eq.s32.totalorder %s32, 0
      %p184 = por %p182, %p183
      %p185 = scmp.ne.s32.totalorder %s174, %s177
      %p186 = scmp.eq.s32.totalorder %s37, 3
      %p187 = por %p185, %p186
      %p188 = scmp.ne.s32.totalorder %s177, %s178
      %p189 = scmp.eq.s32.totalorder %s37, 0
      %p190 = por %p188, %p189
      %p191 = scmp.ne.s32.totalorder %s177, %s178
      %p192 = scmp.eq.s32.totalorder %s38, 3
      %p193 = por %p191, %p192
      %p195 = scmp.ne.s32.totalorder %s178, %s194
      %p196 = scmp.eq.s32.totalorder %s38, 0
      %p197 = por %p195, %p196
      %s198 = ssub.s32 %s40, %s47
      %p199 = scmp.eq.s32.totalorder %s198, 0
      %s201 = sadd.s32 %s200, 1
      %s202 = scalar_select %p199, %s200, %s201
      %p205 = pneg %p199
      %p206 = scmp.eq.s32.totalorder %s32, 3
      %p207 = por %p205, %p206
      %p208 = scmp.ne.s32.totalorder %s200, %s203
      %p209 = scmp.eq.s32.totalorder %s32, 0
      %p210 = por %p208, %p209
      %p211 = scmp.ne.s32.totalorder %s200, %s203
      %p212 = scmp.eq.s32.totalorder %s37, 3
      %p213 = por %p211, %p212
      %p214 = scmp.ne.s32.totalorder %s203, %s204
      %p215 = scmp.eq.s32.totalorder %s37, 0
      %p216 = por %p214, %p215
      %p217 = scmp.ne.s32.totalorder %s203, %s204
      %p218 = scmp.eq.s32.totalorder %s38, 3
      %p219 = por %p217, %p218
      %p221 = scmp.ne.s32.totalorder %s204, %s220
      %p222 = scmp.eq.s32.totalorder %s38, 0
      %p223 = por %p221, %p222
      %s224 = ssub.s32 %s40, %s47
      %p225 = scmp.eq.s32.totalorder %s224, 0
      %s227 = sadd.s32 %s226, 1
      %s228 = scalar_select %p225, %s226, %s227
      %p231 = pneg %p225
      %p232 = scmp.eq.s32.totalorder %s32, 3
      %p233 = por %p231, %p232
      %p234 = scmp.ne.s32.totalorder %s226, %s229
      %p235 = scmp.eq.s32.totalorder %s32, 0
      %p236 = por %p234, %p235
      %p237 = scmp.ne.s32.totalorder %s226, %s229
      %p238 = scmp.eq.s32.totalorder %s37, 3
      %p239 = por %p237, %p238
      %p240 = scmp.ne.s32.totalorder %s229, %s230
      %p241 = scmp.eq.s32.totalorder %s37, 0
      %p242 = por %p240, %p241
      %p243 = scmp.ne.s32.totalorder %s229, %s230
      %p244 = scmp.eq.s32.totalorder %s38, 3
      %p245 = por %p243, %p244
      %p247 = scmp.ne.s32.totalorder %s230, %s246
      %p248 = scmp.eq.s32.totalorder %s38, 0
      %p249 = por %p247, %p248
      %s250 = ssub.s32 %s40, %s47
      %p251 = scmp.eq.s32.totalorder %s250, 0
      %s253 = sadd.s32 %s252, 1
      %s254 = scalar_select %p251, %s252, %s253
      %p257 = pneg %p251
      %p258 = scmp.eq.s32.totalorder %s32, 3
      %p259 = por %p257, %p258
      %p260 = scmp.ne.s32.totalorder %s252, %s255
      %p261 = scmp.eq.s32.totalorder %s32, 0
      %p262 = por %p260, %p261
      %p263 = scmp.ne.s32.totalorder %s252, %s255
      %p264 = scmp.eq.s32.totalorder %s37, 3
      %p265 = por %p263, %p264
      %p266 = scmp.ne.s32.totalorder %s255, %s256
      %p267 = scmp.eq.s32.totalorder %s37, 0
      %p268 = por %p266, %p267
      %p269 = scmp.ne.s32.totalorder %s255, %s256
      %p270 = scmp.eq.s32.totalorder %s38, 3
      %p271 = por %p269, %p270
      %p273 = scmp.ne.s32.totalorder %s256, %s272
      %p274 = scmp.eq.s32.totalorder %s38, 0
      %p275 = por %p273, %p274
      %s276 = ssub.s32 %s40, %s47
      %p277 = scmp.eq.s32.totalorder %s276, 0
      %s279 = sadd.s32 %s278, 1
      %s280 = scalar_select %p277, %s278, %s279
      %p283 = pneg %p277
      %p284 = scmp.eq.s32.totalorder %s32, 3
      %p285 = por %p283, %p284
      %p286 = scmp.ne.s32.totalorder %s278, %s281
      %p287 = scmp.eq.s32.totalorder %s32, 0
      %p288 = por %p286, %p287
      %p289 = scmp.ne.s32.totalorder %s278, %s281
      %p290 = scmp.eq.s32.totalorder %s37, 3
      %p291 = por %p289, %p290
      %p292 = scmp.ne.s32.totalorder %s281, %s282
      %p293 = scmp.eq.s32.totalorder %s37, 0
      %p294 = por %p292, %p293
      %p295 = scmp.ne.s32.totalorder %s281, %s282
      %p296 = scmp.eq.s32.totalorder %s38, 3
      %p297 = por %p295, %p296
      %p299 = scmp.ne.s32.totalorder %s282, %s298
      %p300 = scmp.eq.s32.totalorder %s38, 0
      %p301 = por %p299, %p300
      %s302 = ssub.s32 %s40, %s47
      %p303 = scmp.eq.s32.totalorder %s302, 0
      %s305 = sadd.s32 %s304, 1
      %s306 = scalar_select %p303, %s304, %s305
      %p309 = pneg %p303
      %p310 = scmp.eq.s32.totalorder %s32, 3
      %p311 = por %p309, %p310
      %p312 = scmp.ne.s32.totalorder %s304, %s307
      %p313 = scmp.eq.s32.totalorder %s32, 0
      %p314 = por %p312, %p313
      %p315 = scmp.ne.s32.totalorder %s304, %s307
      %p316 = scmp.eq.s32.totalorder %s37, 3
      %p317 = por %p315, %p316
      %p318 = scmp.ne.s32.totalorder %s307, %s308
      %p319 = scmp.eq.s32.totalorder %s37, 0
      %p320 = por %p318, %p319
      %p321 = scmp.ne.s32.totalorder %s307, %s308
      %p322 = scmp.eq.s32.totalorder %s38, 3
      %p323 = por %p321, %p322
      %p325 = scmp.ne.s32.totalorder %s308, %s324
      %p326 = scmp.eq.s32.totalorder %s38, 0
      %p327 = por %p325, %p326
      %s329 = sadd.s32 %s328, 1
      %p332 = scmp.eq.s32.totalorder %s32, 3
      %p333 = scmp.ne.s32.totalorder %s328, %s330
      %p334 = scmp.eq.s32.totalorder %s32, 0
      %p335 = por %p333, %p334
      %p336 = scmp.ne.s32.totalorder %s328, %s330
      %p337 = scmp.eq.s32.totalorder %s37, 3
      %p338 = por %p336, %p337
      %p339 = scmp.ne.s32.totalorder %s330, %s331
      %p340 = scmp.eq.s32.totalorder %s37, 0
      %p341 = por %p339, %p340
      %p342 = scmp.ne.s32.totalorder %s330, %s331
      %p343 = scmp.eq.s32.totalorder %s38, 3
      %p344 = por %p342, %p343
      %p346 = scmp.ne.s32.totalorder %s331, %s345
      %p347 = scmp.eq.s32.totalorder %s38, 0
      %p348 = por %p346, %p347
      %s350 = sadd.s32 %s349, 1
      %p353 = scmp.eq.s32.totalorder %s32, 3
      %p354 = scmp.ne.s32.totalorder %s349, %s351
      %p355 = scmp.eq.s32.totalorder %s32, 0
      %p356 = por %p354, %p355
      %p357 = scmp.ne.s32.totalorder %s349, %s351
      %p358 = scmp.eq.s32.totalorder %s37, 3
      %p359 = por %p357, %p358
      %p360 = scmp.ne.s32.totalorder %s351, %s352
      %p361 = scmp.eq.s32.totalorder %s37, 0
      %p362 = por %p360, %p361
      %p363 = scmp.ne.s32.totalorder %s351, %s352
      %p364 = scmp.eq.s32.totalorder %s38, 3
      %p365 = por %p363, %p364
      %p367 = scmp.ne.s32.totalorder %s352, %s366
      %p368 = scmp.eq.s32.totalorder %s38, 0
      %p369 = por %p367, %p368
      %s370 = ssub.s32 %s39, %s51
      %p371 = scmp.eq.s32.totalorder %s370, 0
      %s373 = sadd.s32 %s372, 1
      %s374 = scalar_select %p371, %s372, %s373
      %p377 = pneg %p371
      %p378 = scmp.eq.s32.totalorder %s32, 3
      %p379 = por %p377, %p378
      %p380 = scmp.ne.s32.totalorder %s372, %s375
      %p381 = scmp.eq.s32.totalorder %s32, 0
      %p382 = por %p380, %p381
      %p383 = scmp.ne.s32.totalorder %s372, %s375
      %p384 = scmp.eq.s32.totalorder %s37, 3
      %p385 = por %p383, %p384
      %p386 = scmp.ne.s32.totalorder %s375, %s376
      %p387 = scmp.eq.s32.totalorder %s37, 0
      %p388 = por %p386, %p387
      %p389 = scmp.ne.s32.totalorder %s375, %s376
      %p390 = scmp.eq.s32.totalorder %s38, 3
      %p391 = por %p389, %p390
      %p393 = scmp.ne.s32.totalorder %s376, %s392
      %p394 = scmp.eq.s32.totalorder %s38, 0
      %p395 = por %p393, %p394
      %p396 = scmp.le.s32.totalorder 1, %s32
      %p397 = scmp.lt.s32.totalorder %s32, 5
      %p398 = pnand %p396, %p397
      %p399 = pneg %p398
      // Predicated region
      $region9: #{forward.1} parent=5 // pred_check
        _
      $region10: #{forward.1} parent=5 // pred_check_branch
        %401 = sbr.rel (%p398) target = $region12
      $region11: #{forward.1} parent=5 // pred_region
        %s402 = ssub.s32 %s32, 1
        // Predicated region
        $region13: #{forward.1} parent=11 // pred_check
          %p403 = pneg %p91
        $region14: #{forward.1} parent=11 // pred_check_branch
          %405 = sbr.rel (%p403) target = $region16
        $region15: #{forward.1} parent=11 // pred_region
          _
        $region16: #{forward.1} parent=11 // pred_fallthru
          _
        // Predicated region
        $region17: #{forward.1} parent=11 // pred_check
          %p406 = pneg %p112
        $region18: #{forward.1} parent=11 // pred_check_branch
          %408 = sbr.rel (%p406) target = $region20
        $region19: #{forward.1} parent=11 // pred_region
          _
        $region20: #{forward.1} parent=11 // pred_fallthru
          _
        // Predicated region
        $region21: #{forward.1} parent=11 // pred_check
          %p409 = pneg %p341
        $region22: #{forward.1} parent=11 // pred_check_branch
          %411 = sbr.rel (%p409) target = $region24
        $region23: #{forward.1} parent=11 // pred_region
          %s413 = ssub.s32 16, 16
          %414 = vsyncadd [#allocation9], %s413
          %s416 = sshll.u32 [#allocation10], 4
          %s417 = int_to_ptr.vmem [resolvable:$true] %s416
          %419 = dma.hbm_to_vmem [thread:$0]  %s12, 16, %s417, [#allocation9]
        $region24: #{forward.1} parent=11 // pred_fallthru
          _
        // Predicated region
        $region25: #{forward.1} parent=11 // pred_check
          %p420 = pneg %p362
        $region26: #{forward.1} parent=11 // pred_check_branch
          %422 = sbr.rel (%p420) target = $region28
        $region27: #{forward.1} parent=11 // pred_region
          _
        $region28: #{forward.1} parent=11 // pred_fallthru
          _
      $region12: #{forward.1} parent=5 // pred_fallthru
        _
      %p423 = scmp.lt.s32.totalorder %s32, 4
      // Predicated region
      $region29: #{forward.1} parent=5 // pred_check
        %p424 = pneg %p423
      $region30: #{forward.1} parent=5 // pred_check_branch
        %426 = sbr.rel (%p424) target = $region32
      $region31: #{forward.1} parent=5 // pred_region
        // Predicated region
        $region33: #{forward.1} parent=31 // pred_check
          %p427 = pneg %p64
        $region34: #{forward.1} parent=31 // pred_check_branch
          %429 = sbr.rel (%p427) target = $region36
        $region35: #{forward.1} parent=31 // pred_region
          %p430 = scmp.lt.s32.totalorder %s39, 1
          %s431 = scalar_select %p430, %s39, 1
          %s432 = smul.addr %s431, 4
          %s433 = scalar_lea.vmem %s1, %s432
        $region36: #{forward.1} parent=31 // pred_fallthru
          _
        // Predicated region
        $region37: #{forward.1} parent=31 // pred_check
          %p434 = pneg %p132
        $region38: #{forward.1} parent=31 // pred_check_branch
          %436 = sbr.rel (%p434) target = $region40
        $region39: #{forward.1} parent=31 // pred_region
          %p437 = scmp.lt.s32.totalorder %s40, 1
          %s438 = scalar_select %p437, %s40, 1
          %s439 = scalar_lea.vmem %s4, %s438
        $region40: #{forward.1} parent=31 // pred_fallthru
          _
        // Predicated region
        $region41: #{forward.1} parent=31 // pred_check
          %p440 = pneg %p158
        $region42: #{forward.1} parent=31 // pred_check_branch
          %442 = sbr.rel (%p440) target = $region44
        $region43: #{forward.1} parent=31 // pred_region
          %p443 = scmp.lt.s32.totalorder %s40, 1
          %s444 = scalar_select %p443, %s40, 1
          %s445 = smul.addr %s444, 32
          %s446 = smul.addr %s445, 4
          %s447 = scalar_lea.vmem %s5, %s446
        $region44: #{forward.1} parent=31 // pred_fallthru
          _
        // Predicated region
        $region45: #{forward.1} parent=31 // pred_check
          %p448 = pneg %p184
        $region46: #{forward.1} parent=31 // pred_check_branch
          %450 = sbr.rel (%p448) target = $region48
        $region47: #{forward.1} parent=31 // pred_region
          %p451 = scmp.lt.s32.totalorder %s40, 1
          %s452 = scalar_select %p451, %s40, 1
          %s453 = smul.addr %s452, 32
          %s454 = smul.addr %s453, 4
          %s455 = scalar_lea.vmem %s6, %s454
        $region48: #{forward.1} parent=31 // pred_fallthru
          _
        // Predicated region
        $region49: #{forward.1} parent=31 // pred_check
          %p456 = pneg %p210
        $region50: #{forward.1} parent=31 // pred_check_branch
          %458 = sbr.rel (%p456) target = $region52
        $region51: #{forward.1} parent=31 // pred_region
          %s459 = sand.u32 %s200, 1
          %s460 = scalar_lea.sflag [#allocation7], %s459
          %s461 = sand.u32 %s200, 1
          %s462 = smul.addr %s461, 64
          %s463 = scalar_lea.vmem [#allocation6], %s462
          %s465 = ssub.s32 1024, 1024
          %466 = vsyncadd %s460, %s465
          %s467 = smul.addr %s40, 16
          %s468 = smul.addr %s467, 64
          %s469 = scalar_lea.hbm %s7, %s468
          %s470 = sshll.u32 %s463, 4
          %s471 = int_to_ptr.vmem [resolvable:$true] %s470
          %476 = dma.hbm_to_vmem [thread:$0]  %s469, 1024, %s471, %s460, 64, 64, 4
        $region52: #{forward.1} parent=31 // pred_fallthru
          _
        // Predicated region
        $region53: #{forward.1} parent=31 // pred_check
          %p477 = pneg %p236
        $region54: #{forward.1} parent=31 // pred_check_branch
          %479 = sbr.rel (%p477) target = $region56
        $region55: #{forward.1} parent=31 // pred_region
          %p480 = scmp.lt.s32.totalorder %s40, 1
          %s481 = scalar_select %p480, %s40, 1
          %s482 = scalar_lea.vmem %s8, %s481
        $region56: #{forward.1} parent=31 // pred_fallthru
          _
        // Predicated region
        $region57: #{forward.1} parent=31 // pred_check
          %p483 = pneg %p262
        $region58: #{forward.1} parent=31 // pred_check_branch
          %485 = sbr.rel (%p483) target = $region60
        $region59: #{forward.1} parent=31 // pred_region
          %p486 = scmp.lt.s32.totalorder %s40, 1
          %s487 = scalar_select %p486, %s40, 1
          %s488 = smul.addr %s487, 32
          %s489 = smul.addr %s488, 4
          %s490 = scalar_lea.vmem %s9, %s489
        $region60: #{forward.1} parent=31 // pred_fallthru
          _
        // Predicated region
        $region61: #{forward.1} parent=31 // pred_check
          %p491 = pneg %p288
        $region62: #{forward.1} parent=31 // pred_check_branch
          %493 = sbr.rel (%p491) target = $region64
        $region63: #{forward.1} parent=31 // pred_region
          %p494 = scmp.lt.s32.totalorder %s40, 1
          %s495 = scalar_select %p494, %s40, 1
          %s496 = smul.addr %s495, 32
          %s497 = smul.addr %s496, 4
          %s498 = scalar_lea.vmem %s10, %s497
        $region64: #{forward.1} parent=31 // pred_fallthru
          _
        // Predicated region
        $region65: #{forward.1} parent=31 // pred_check
          %p499 = pneg %p314
        $region66: #{forward.1} parent=31 // pred_check_branch
          %501 = sbr.rel (%p499) target = $region68
        $region67: #{forward.1} parent=31 // pred_region
          %s502 = sand.u32 %s32, 1
          %s503 = scalar_lea.sflag [#allocation9], %s502
          %s504 = sand.u32 %s304, 1
          %s505 = smul.addr %s504, 128
          %s506 = scalar_lea.vmem [#allocation8], %s505
          %s508 = ssub.s32 2048, 2048
          %509 = vsyncadd %s503, %s508
          %s510 = smul.addr %s40, 32
          %s511 = smul.addr %s510, 64
          %s512 = scalar_lea.hbm %s11, %s511
          %s513 = sshll.u32 %s506, 4
          %s514 = int_to_ptr.vmem [resolvable:$true] %s513
          %519 = dma.hbm_to_vmem [thread:$0]  %s512, 2048, %s514, %s503, 64, 64, 4
        $region68: #{forward.1} parent=31 // pred_fallthru
          _
      $region32: #{forward.1} parent=5 // pred_fallthru
        _
      %p520 = scmp.le.s32.totalorder 1, %s32
      %p521 = scmp.lt.s32.totalorder %s32, 5
      %p522 = pnand %p520, %p521
      %p523 = pneg %p522
      // Predicated region
      $region69: #{forward.1} parent=5 // pred_check
        _
      $region70: #{forward.1} parent=5 // pred_check_branch
        %525 = sbr.rel (%p522) target = $region72
      $region71: #{forward.1} parent=5 // pred_region
        %s526 = ssub.s32 %s32, 1
        %s527 = sand.u32 %s203, 1
        %s528 = scalar_lea.sflag [#allocation7], %s527
        %s529 = sand.u32 %s203, 1
        %s530 = smul.addr %s529, 64
        %s531 = scalar_lea.vmem [#allocation6], %s530
        // Predicated region
        $region73: #{forward.1} parent=71 // pred_check
          %p532 = pneg %p216
        $region74: #{forward.1} parent=71 // pred_check_branch
          %534 = sbr.rel (%p532) target = $region76
        $region75: #{forward.1} parent=71 // pred_region
          %535 = dma.done %s528, 1024
        $region76: #{forward.1} parent=71 // pred_fallthru
          _
        %s536 = sand.u32 %s37, 1
        %s537 = scalar_lea.sflag [#allocation9], %s536
        %s538 = sand.u32 %s307, 1
        %s539 = smul.addr %s538, 128
        %s540 = scalar_lea.vmem [#allocation8], %s539
        // Predicated region
        $region77: #{forward.1} parent=71 // pred_check
          %p541 = pneg %p320
        $region78: #{forward.1} parent=71 // pred_check_branch
          %543 = sbr.rel (%p541) target = $region80
        $region79: #{forward.1} parent=71 // pred_region
          %544 = dma.done %s537, 2048
        $region80: #{forward.1} parent=71 // pred_fallthru
          _
        // Predicated region
        $region81: #{forward.1} parent=71 // pred_check
          %p545 = pneg %p341
        $region82: #{forward.1} parent=71 // pred_check_branch
          %547 = sbr.rel (%p545) target = $region84
        $region83: #{forward.1} parent=71 // pred_region
          %548 = dma.done [#allocation9], 16
        $region84: #{forward.1} parent=71 // pred_fallthru
          _
        %p549 = scmp.lt.s32.totalorder %s41, 1
        %s550 = scalar_select %p549, %s41, 1
        %s551 = smul.addr %s550, 4
        %s552 = scalar_lea.vmem %s1, %s551
        %p553 = pneg %p70
        %p554 = pneg %p67
        %p555 = pneg %p91
        %p556 = pneg %p88
        %p557 = pneg %p112
        %p558 = pneg %p109
        %p559 = scmp.lt.s32.totalorder %s42, 1
        %s560 = scalar_select %p559, %s42, 1
        %s561 = scalar_lea.vmem %s4, %s560
        %p562 = pneg %p138
        %p563 = pneg %p135
        %p564 = scmp.lt.s32.totalorder %s42, 1
        %s565 = scalar_select %p564, %s42, 1
        %s566 = smul.addr %s565, 32
        %s567 = smul.addr %s566, 4
        %s568 = scalar_lea.vmem %s5, %s567
        %p569 = pneg %p164
        %p570 = pneg %p161
        %p571 = scmp.lt.s32.totalorder %s42, 1
        %s572 = scalar_select %p571, %s42, 1
        %s573 = smul.addr %s572, 32
        %s574 = smul.addr %s573, 4
        %s575 = scalar_lea.vmem %s6, %s574
        %p576 = pneg %p190
        %p577 = pneg %p187
        %s578 = sand.u32 %s203, 1
        %s579 = scalar_lea.sflag [#allocation7], %s578
        %s580 = sand.u32 %s203, 1
        %s581 = smul.addr %s580, 64
        %s582 = scalar_lea.vmem [#allocation6], %s581
        %p583 = pneg %p216
        %p584 = pneg %p213
        %p585 = scmp.lt.s32.totalorder %s42, 1
        %s586 = scalar_select %p585, %s42, 1
        %s587 = scalar_lea.vmem %s8, %s586
        %p588 = pneg %p242
        %p589 = pneg %p239
        %p590 = scmp.lt.s32.totalorder %s42, 1
        %s591 = scalar_select %p590, %s42, 1
        %s592 = smul.addr %s591, 32
        %s593 = smul.addr %s592, 4
        %s594 = scalar_lea.vmem %s9, %s593
        %p595 = pneg %p268
        %p596 = pneg %p265
        %p597 = scmp.lt.s32.totalorder %s42, 1
        %s598 = scalar_select %p597, %s42, 1
        %s599 = smul.addr %s598, 32
        %s600 = smul.addr %s599, 4
        %s601 = scalar_lea.vmem %s10, %s600
        %p602 = pneg %p294
        %p603 = pneg %p291
        %s604 = sand.u32 %s37, 1
        %s605 = scalar_lea.sflag [#allocation9], %s604
        %s606 = sand.u32 %s307, 1
        %s607 = smul.addr %s606, 128
        %s608 = scalar_lea.vmem [#allocation8], %s607
        %p609 = pneg %p320
        %p610 = pneg %p317
        %p611 = pneg %p341
        %p612 = pneg %p338
        %p613 = pneg %p362
        %p614 = pneg %p359
        %p615 = pneg %p388
        %p616 = pneg %p385
        %p617 = scmp.lt.s32.totalorder %s41, 1
        %s618 = scalar_select %p617, %s41, 1
        %s619 = scalar_lea.vmem %s14, %s618
        %p620 = scmp.lt.s32.totalorder %s41, 1
        %s621 = scalar_select %p620, %s41, 1
        %s622 = smul.addr %s621, 4
        %s623 = scalar_lea.vmem %s1, %s622
        %p624 = scmp.lt.s32.totalorder %s42, 1
        %s625 = scalar_select %p624, %s42, 1
        %s626 = scalar_lea.vmem %s4, %s625
        %p627 = scmp.lt.s32.totalorder %s42, 1
        %s628 = scalar_select %p627, %s42, 1
        %s629 = smul.addr %s628, 32
        %s630 = smul.addr %s629, 4
        %s631 = scalar_lea.vmem %s5, %s630
        %p632 = scmp.lt.s32.totalorder %s42, 1
        %s633 = scalar_select %p632, %s42, 1
        %s634 = smul.addr %s633, 32
        %s635 = smul.addr %s634, 4
        %s636 = scalar_lea.vmem %s6, %s635
        %p637 = scmp.lt.s32.totalorder %s42, 1
        %s638 = scalar_select %p637, %s42, 1
        %s639 = scalar_lea.vmem %s8, %s638
        %p640 = scmp.lt.s32.totalorder %s42, 1
        %s641 = scalar_select %p640, %s42, 1
        %s642 = smul.addr %s641, 32
        %s643 = smul.addr %s642, 4
        %s644 = scalar_lea.vmem %s9, %s643
        %p645 = scmp.lt.s32.totalorder %s42, 1
        %s646 = scalar_select %p645, %s42, 1
        %s647 = smul.addr %s646, 32
        %s648 = smul.addr %s647, 4
        %s649 = scalar_lea.vmem %s10, %s648
        %p650 = scmp.lt.s32.totalorder %s41, 1
        %s651 = scalar_select %p650, %s41, 1
        %s652 = scalar_lea.vmem %s14, %s651
        %p654 = scmp.eq.s32.totalorder %s42, 0
        // Predicated region
        $region85: #{forward.1} parent=71 // pred_check
          %p655 = pneg %p654
        $region86: #{forward.1} parent=71 // pred_check_branch
          %657 = sbr.rel (%p655) target = $region88
        $region87: #{forward.1} parent=71 // pred_region
          %v658 = vld [vmem:[%s623] sm:$0xf]
          %v659 = vunpack.c.l.bf16 %v658
          %660 = vst [vmem:[#allocation2] sm:$0xff] %v659
        $region88: #{forward.1} parent=71 // pred_fallthru
          _
        %v661 = vld [vmem:[#allocation2] sm:$0xff]
        %v662 = vld [vmem:[%s2] sm:$0xff]
        %v663 = vld [vmem:[%s3] sm:$0xff]
        %v664 = vmul.f32 %v661, %v661
        %665 = vadd.xlane.f32.xlu0 %v664
        %v666 = vpop.xlane.xlu0 %665
        %v667 = vrcp.pop 128.0
        %v668 = vmul.f32 %v666, %v667
        %v669 = vadd.f32 %v668, 1e-06
        %v670 = vrsqrt.pop %v669
        %v671 = vmul.f32 %v661, %v670
        %v672 = vld [vmem:[%s626] sm:$0x1]
        %v674 = vlaneseq
        %v675 = vshrl.u32 %v674, 7
        %v676 = vsub.s32 0, %v675
        %v677 = vrot.slane %v672, %v676
        %v679 = vmul.f32 %v671, %v677
        %v680 = vpack.c.bf16 %v679, %v679
        %v681 = vld [vmem:[%s631] sm:$0xff]
        %v682 = vld [vmem:[%s631 + $0x8] sm:$0xff]
        %v683 = vld [vmem:[%s631 + $0x10] sm:$0xff]
        %v684 = vld [vmem:[%s631 + $0x18] sm:$0xff]
        %v685 = vld [vmem:[%s631 + $0x20] sm:$0xff]
        %v686 = vld [vmem:[%s631 + $0x28] sm:$0xff]
        %v687 = vld [vmem:[%s631 + $0x30] sm:$0xff]
        %v688 = vld [vmem:[%s631 + $0x38] sm:$0xff]
        %v689 = vld [vmem:[%s631 + $0x40] sm:$0xff]
        %v690 = vld [vmem:[%s631 + $0x48] sm:$0xff]
        %v691 = vld [vmem:[%s631 + $0x50] sm:$0xff]
        %v692 = vld [vmem:[%s631 + $0x58] sm:$0xff]
        %v693 = vld [vmem:[%s631 + $0x60] sm:$0xff]
        %v694 = vld [vmem:[%s631 + $0x68] sm:$0xff]
        %v695 = vld [vmem:[%s631 + $0x70] sm:$0xff]
        %v696 = vld [vmem:[%s631 + $0x78] sm:$0xff]
        %v713 = vunpack.c.l.b16 %v681
        %v714 = vunpack.c.h.b16 %v681
        %v715 = vunpack.c.l.b16 %v682
        %v716 = vunpack.c.h.b16 %v682
        %v717 = vunpack.c.l.b16 %v683
        %v718 = vunpack.c.h.b16 %v683
        %v719 = vunpack.c.l.b16 %v684
        %v720 = vunpack.c.h.b16 %v684
        %v721 = vunpack.c.l.b16 %v685
        %v722 = vunpack.c.h.b16 %v685
        %v723 = vunpack.c.l.b16 %v686
        %v724 = vunpack.c.h.b16 %v686
        %v725 = vunpack.c.l.b16 %v687
        %v726 = vunpack.c.h.b16 %v687
        %v727 = vunpack.c.l.b16 %v688
        %v728 = vunpack.c.h.b16 %v688
        %v729 = vunpack.c.l.b16 %v689
        %v730 = vunpack.c.h.b16 %v689
        %v731 = vunpack.c.l.b16 %v690
        %v732 = vunpack.c.h.b16 %v690
        %v733 = vunpack.c.l.b16 %v691
        %v734 = vunpack.c.h.b16 %v691
        %v735 = vunpack.c.l.b16 %v692
        %v736 = vunpack.c.h.b16 %v692
        %v737 = vunpack.c.l.b16 %v693
        %v738 = vunpack.c.h.b16 %v693
        %v739 = vunpack.c.l.b16 %v694
        %v740 = vunpack.c.h.b16 %v694
        %v741 = vunpack.c.l.b16 %v695
        %v742 = vunpack.c.h.b16 %v695
        %v743 = vunpack.c.l.b16 %v696
        %v744 = vunpack.c.h.b16 %v696
        %v745 = vpack.c.b16 %v715, %v713
        %v746 = vpack.c.b16 %v716, %v714
        %v747 = vpack.c.b16 %v719, %v717
        %v748 = vpack.c.b16 %v720, %v718
        %v749 = vpack.c.b16 %v723, %v721
        %v750 = vpack.c.b16 %v724, %v722
        %v751 = vpack.c.b16 %v727, %v725
        %v752 = vpack.c.b16 %v728, %v726
        %v753 = vpack.c.b16 %v731, %v729
        %v754 = vpack.c.b16 %v732, %v730
        %v755 = vpack.c.b16 %v735, %v733
        %v756 = vpack.c.b16 %v736, %v734
        %v757 = vpack.c.b16 %v739, %v737
        %v758 = vpack.c.b16 %v740, %v738
        %v759 = vpack.c.b16 %v743, %v741
        %v760 = vpack.c.b16 %v744, %v742
        %777 = vmatprep.subr.bf16.mxu0 %v746
        %778 = vmatpush1.bf16.msra.mxu0 %v745
        %779 = vmatprep.subr.bf16.mxu0 %v748
        %780 = vmatpush1.bf16.msra.mxu0 %v747
        %781 = vmatprep.subr.bf16.mxu0 %v750
        %782 = vmatpush1.bf16.msra.mxu0 %v749
        %783 = vmatprep.subr.bf16.mxu0 %v752
        %784 = vmatpush1.bf16.msra.mxu0 %v751
        %785 = vmatprep.subr.bf16.mxu0 %v754
        %786 = vmatpush1.bf16.msra.mxu0 %v753
        %787 = vmatprep.subr.bf16.mxu0 %v756
        %788 = vmatpush1.bf16.msra.mxu0 %v755
        %789 = vmatprep.subr.bf16.mxu0 %v758
        %790 = vmatpush1.bf16.msra.mxu0 %v757
        %791 = vmatprep.subr.bf16.mxu0 %v760
        %792 = vmatpush1.bf16.msra.mxu0 %v759
        %793 = vmatprep.subr.bf16.mxu0 0
        %794 = vmatpush1.bf16.msra.mxu0 0
        %795 = vmatprep.subr.bf16.mxu0 0
        %796 = vmatpush1.bf16.msra.mxu0 0
        %797 = vmatprep.subr.bf16.mxu0 0
        %798 = vmatpush1.bf16.msra.mxu0 0
        %799 = vmatprep.subr.bf16.mxu0 0
        %800 = vmatpush1.bf16.msra.mxu0 0
        %801 = vmatprep.subr.bf16.mxu0 0
        %802 = vmatpush1.bf16.msra.mxu0 0
        %803 = vmatprep.subr.bf16.mxu0 0
        %804 = vmatpush1.bf16.msra.mxu0 0
        %805 = vmatprep.subr.bf16.mxu0 0
        %806 = vmatpush1.bf16.msra.mxu0 0
        %807 = vmatprep.subr.bf16.mxu0 0
        %808 = vmatpush1.bf16.msra.mxu0 0
        %809 = vmatprep.mubr.bf16.mxu0 0
        %810 = vmatmul.mubr.bf16.gmra.mrb[0].mxu0 %v680
        %v811 = vpop.f32.mrb[0].mxu0
        %v812 = vadd.f32 0.0, %v811
        %v813 = vpop.f32.mrb[0].mxu0
        %v814 = vadd.f32 0.0, %v813
        %v815 = vpop.f32.mrb[0].mxu0
        %v816 = vpop.f32.mrb[0].mxu0
        %817 = vdwg.mxu0
        %v818 = vld [vmem:[%s636] sm:$0xff]
        %v819 = vld [vmem:[%s636 + $0x8] sm:$0xff]
        %v820 = vld [vmem:[%s636 + $0x10] sm:$0xff]
        %v821 = vld [vmem:[%s636 + $0x18] sm:$0xff]
        %v822 = vld [vmem:[%s636 + $0x20] sm:$0xff]
        %v823 = vld [vmem:[%s636 + $0x28] sm:$0xff]
        %v824 = vld [vmem:[%s636 + $0x30] sm:$0xff]
        %v825 = vld [vmem:[%s636 + $0x38] sm:$0xff]
        %v826 = vld [vmem:[%s636 + $0x40] sm:$0xff]
        %v827 = vld [vmem:[%s636 + $0x48] sm:$0xff]
        %v828 = vld [vmem:[%s636 + $0x50] sm:$0xff]
        %v829 = vld [vmem:[%s636 + $0x58] sm:$0xff]
        %v830 = vld [vmem:[%s636 + $0x60] sm:$0xff]
        %v831 = vld [vmem:[%s636 + $0x68] sm:$0xff]
        %v832 = vld [vmem:[%s636 + $0x70] sm:$0xff]
        %v833 = vld [vmem:[%s636 + $0x78] sm:$0xff]
        %v850 = vunpack.c.l.b16 %v818
        %v851 = vunpack.c.h.b16 %v818
        %v852 = vunpack.c.l.b16 %v819
        %v853 = vunpack.c.h.b16 %v819
        %v854 = vunpack.c.l.b16 %v820
        %v855 = vunpack.c.h.b16 %v820
        %v856 = vunpack.c.l.b16 %v821
        %v857 = vunpack.c.h.b16 %v821
        %v858 = vunpack.c.l.b16 %v822
        %v859 = vunpack.c.h.b16 %v822
        %v860 = vunpack.c.l.b16 %v823
        %v861 = vunpack.c.h.b16 %v823
        %v862 = vunpack.c.l.b16 %v824
        %v863 = vunpack.c.h.b16 %v824
        %v864 = vunpack.c.l.b16 %v825
        %v865 = vunpack.c.h.b16 %v825
        %v866 = vunpack.c.l.b16 %v826
        %v867 = vunpack.c.h.b16 %v826
        %v868 = vunpack.c.l.b16 %v827
        %v869 = vunpack.c.h.b16 %v827
        %v870 = vunpack.c.l.b16 %v828
        %v871 = vunpack.c.h.b16 %v828
        %v872 = vunpack.c.l.b16 %v829
        %v873 = vunpack.c.h.b16 %v829
        %v874 = vunpack.c.l.b16 %v830
        %v875 = vunpack.c.h.b16 %v830
        %v876 = vunpack.c.l.b16 %v831
        %v877 = vunpack.c.h.b16 %v831
        %v878 = vunpack.c.l.b16 %v832
        %v879 = vunpack.c.h.b16 %v832
        %v880 = vunpack.c.l.b16 %v833
        %v881 = vunpack.c.h.b16 %v833
        %v882 = vpack.c.b16 %v852, %v850
        %v883 = vpack.c.b16 %v853, %v851
        %v884 = vpack.c.b16 %v856, %v854
        %v885 = vpack.c.b16 %v857, %v855
        %v886 = vpack.c.b16 %v860, %v858
        %v887 = vpack.c.b16 %v861, %v859
        %v888 = vpack.c.b16 %v864, %v862
        %v889 = vpack.c.b16 %v865, %v863
        %v890 = vpack.c.b16 %v868, %v866
        %v891 = vpack.c.b16 %v869, %v867
        %v892 = vpack.c.b16 %v872, %v870
        %v893 = vpack.c.b16 %v873, %v871
        %v894 = vpack.c.b16 %v876, %v874
        %v895 = vpack.c.b16 %v877, %v875
        %v896 = vpack.c.b16 %v880, %v878
        %v897 = vpack.c.b16 %v881, %v879
        %914 = vmatprep.subr.bf16.mxu0 %v883
        %915 = vmatpush1.bf16.msra.mxu0 %v882
        %916 = vmatprep.subr.bf16.mxu0 %v885
        %917 = vmatpush1.bf16.msra.mxu0 %v884
        %918 = vmatprep.subr.bf16.mxu0 %v887
        %919 = vmatpush1.bf16.msra.mxu0 %v886
        %920 = vmatprep.subr.bf16.mxu0 %v889
        %921 = vmatpush1.bf16.msra.mxu0 %v888
        %922 = vmatprep.subr.bf16.mxu0 %v891
        %923 = vmatpush1.bf16.msra.mxu0 %v890
        %924 = vmatprep.subr.bf16.mxu0 %v893
        %925 = vmatpush1.bf16.msra.mxu0 %v892
        %926 = vmatprep.subr.bf16.mxu0 %v895
        %927 = vmatpush1.bf16.msra.mxu0 %v894
        %928 = vmatprep.subr.bf16.mxu0 %v897
        %929 = vmatpush1.bf16.msra.mxu0 %v896
        %930 = vmatprep.subr.bf16.mxu0 0
        %931 = vmatpush1.bf16.msra.mxu0 0
        %932 = vmatprep.subr.bf16.mxu0 0
        %933 = vmatpush1.bf16.msra.mxu0 0
        %934 = vmatprep.subr.bf16.mxu0 0
        %935 = vmatpush1.bf16.msra.mxu0 0
        %936 = vmatprep.subr.bf16.mxu0 0
        %937 = vmatpush1.bf16.msra.mxu0 0
        %938 = vmatprep.subr.bf16.mxu0 0
        %939 = vmatpush1.bf16.msra.mxu0 0
        %940 = vmatprep.subr.bf16.mxu0 0
        %941 = vmatpush1.bf16.msra.mxu0 0
        %942 = vmatprep.subr.bf16.mxu0 0
        %943 = vmatpush1.bf16.msra.mxu0 0
        %944 = vmatprep.subr.bf16.mxu0 0
        %945 = vmatpush1.bf16.msra.mxu0 0
        %946 = vmatprep.mubr.bf16.mxu0 0
        %947 = vmatmul.mubr.bf16.gmra.mrb[0].mxu0 %v680
        %v948 = vpop.f32.mrb[0].mxu0
        %v949 = vadd.f32 0.0, %v948
        %v950 = vpop.f32.mrb[0].mxu0
        %v951 = vadd.f32 0.0, %v950
        %v952 = vpop.f32.mrb[0].mxu0
        %v953 = vpop.f32.mrb[0].mxu0
        %954 = vdwg.mxu0
        %v955 = vmul.f32 %v812, %v662
        %v956 = vmul.f32 %v949, %v663
        %v957 = vadd.f32 %v955, %v956
        %v958 = vmul.f32 %v957, 0.17677669
        %v959 = vmul.f32 %v814, %v662
        %v960 = vmul.f32 %v951, %v663
        %v961 = vadd.f32 %v959, %v960
        %v962 = vpack.c.bf16 %v958, %v958
        %v963 = vpack.c.bf16 %v961, %v961
        %v964 = vpack.c.bf16 %v814, %v814
        %v965 = vlaneseq
        %v966 = vshrl.u32 %v965, 7
        %v967 = vlaneseq
        %v968 = vand.u32 %v967, 127
        %vm969 = vcmp.le.s32.totalorder %v968, %v966
        %vm970 = vcmask 261120
        %v972 = vsel %vm970, %v962, 0
        %v975 = vsel %vm970, %v963, 0
        %977 = vmatprep.subr.bf16.mxu0 0
        %978 = vmatpush1.bf16.xpose.msra.mxu0 %v975
        %979 = vmatprep.subr.bf16.mxu0 0
        %980 = vmatpush1.bf16.xpose.msra.mxu0 0
        %981 = vmatprep.subr.bf16.mxu0 0
        %982 = vmatpush1.bf16.xpose.msra.mxu0 0
        %983 = vmatprep.subr.bf16.mxu0 0
        %984 = vmatpush1.bf16.xpose.msra.mxu0 0
        %985 = vmatprep.subr.bf16.mxu0 0
        %986 = vmatpush1.bf16.xpose.msra.mxu0 0
        %987 = vmatprep.subr.bf16.mxu0 0
        %988 = vmatpush1.bf16.xpose.msra.mxu0 0
        %989 = vmatprep.subr.bf16.mxu0 0
        %990 = vmatpush1.bf16.xpose.msra.mxu0 0
        %991 = vmatprep.subr.bf16.mxu0 0
        %992 = vmatpush1.bf16.xpose.msra.mxu0 0
        %993 = vmatprep.subr.bf16.mxu0 0
        %994 = vmatpush1.bf16.xpose.msra.mxu0 0
        %995 = vmatprep.subr.bf16.mxu0 0
        %996 = vmatpush1.bf16.xpose.msra.mxu0 0
        %997 = vmatprep.subr.bf16.mxu0 0
        %998 = vmatpush1.bf16.xpose.msra.mxu0 0
        %999 = vmatprep.subr.bf16.mxu0 0
        %1000 = vmatpush1.bf16.xpose.msra.mxu0 0
        %1001 = vmatprep.subr.bf16.mxu0 0
        %1002 = vmatpush1.bf16.xpose.msra.mxu0 0
        %1003 = vmatprep.subr.bf16.mxu0 0
        %1004 = vmatpush1.bf16.xpose.msra.mxu0 0
        %1005 = vmatprep.subr.bf16.mxu0 0
        %1006 = vmatpush1.bf16.xpose.msra.mxu0 0
        %1007 = vmatprep.subr.bf16.mxu0 0
        %1008 = vmatpush1.bf16.xpose.msra.mxu0 0
        %1009 = vmatprep.mubr.bf16.mxu0 0
        %1010 = vmatmul.mubr.bf16.gmra.mrb[0].mxu0 %v972
        %v1011 = vpop.f32.mrb[0].mxu0
        %v1012 = vadd.f32 0.0, %v1011
        %v1013 = vpop.f32.mrb[0].mxu0
        %v1014 = vpop.f32.mrb[0].mxu0
        %v1015 = vpop.f32.mrb[0].mxu0
        %1016 = vdwg.mxu0
        %v1017 = vsel %vm969, %v1012, -1e+30
        %vm1018 = vcmask 64512
        %v1019 = vsel %vm1018, %v1017, -inf
        %1020 = vmax.xlane.f32.xlu0 %v1019
        %v1021 = vpop.xlane.xlu0 %1020
        %v1022 = vsub.f32 %v1017, %v1021
        %v1023 = vmul.f32 %v1022, 1.442695
        %v1024 = vpow.pop %v1023
        %v1025 = vsel %vm1018, %v1024, 0.0
        %1026 = vadd.xlane.f32.xlu0 %v1025
        %v1027 = vpop.xlane.xlu0 %1026
        %v1028 = vpack.c.bf16 %v1024, %v1024
        %1030 = vrot.lane.b32.xlu0 %v964, 64
        %v1031 = vpop.permute.xlu0 %1030
        %v1033 = vsel %vm1018, %v1028, 0
        %vm1035 = vcmask 1043456
        %v1037 = vsel %vm1035, %v1031, 0
        %1039 = vmatprep.subr.bf16.mxu0 0
        %1040 = vmatpush1.bf16.msra.mxu0 %v1037
        %1041 = vmatprep.subr.bf16.mxu0 0
        %1042 = vmatpush1.bf16.msra.mxu0 0
        %1043 = vmatprep.subr.bf16.mxu0 0
        %1044 = vmatpush1.bf16.msra.mxu0 0
        %1045 = vmatprep.subr.bf16.mxu0 0
        %1046 = vmatpush1.bf16.msra.mxu0 0
        %1047 = vmatprep.subr.bf16.mxu0 0
        %1048 = vmatpush1.bf16.msra.mxu0 0
        %1049 = vmatprep.subr.bf16.mxu0 0
        %1050 = vmatpush1.bf16.msra.mxu0 0
        %1051 = vmatprep.subr.bf16.mxu0 0
        %1052 = vmatpush1.bf16.msra.mxu0 0
        %1053 = vmatprep.subr.bf16.mxu0 0
        %1054 = vmatpush1.bf16.msra.mxu0 0
        %1055 = vmatprep.subr.bf16.mxu0 0
        %1056 = vmatpush1.bf16.msra.mxu0 0
        %1057 = vmatprep.subr.bf16.mxu0 0
        %1058 = vmatpush1.bf16.msra.mxu0 0
        %1059 = vmatprep.subr.bf16.mxu0 0
        %1060 = vmatpush1.bf16.msra.mxu0 0
        %1061 = vmatprep.subr.bf16.mxu0 0
        %1062 = vmatpush1.bf16.msra.mxu0 0
        %1063 = vmatprep.subr.bf16.mxu0 0
        %1064 = vmatpush1.bf16.msra.mxu0 0
        %1065 = vmatprep.subr.bf16.mxu0 0
        %1066 = vmatpush1.bf16.msra.mxu0 0
        %1067 = vmatprep.subr.bf16.mxu0 0
        %1068 = vmatpush1.bf16.msra.mxu0 0
        %1069 = vmatprep.subr.bf16.mxu0 0
        %1070 = vmatpush1.bf16.msra.mxu0 0
        %1071 = vmatprep.mubr.bf16.mxu0 0
        %1072 = vmatmul.mubr.bf16.gmra.mrb[0].mxu0 %v1033
        %v1073 = vpop.f32.mrb[0].mxu0
        %v1074 = vadd.f32 0.0, %v1073
        %v1075 = vpop.f32.mrb[0].mxu0
        %v1076 = vpop.f32.mrb[0].mxu0
        %v1077 = vpop.f32.mrb[0].mxu0
        %1078 = vdwg.mxu0
        %v1079 = vrcp.pop %v1027
        %v1080 = vmul.f32 %v1074, %v1079
        %1081 = vst.msk [vmem:[#allocation3] sm:$0xff] %vm970, %v1080
        %1083 = vrot.lane.b32.xlu0 %v962, 96
        %v1084 = vpop.permute.xlu0 %1083
        %v1086 = vsel %vm970, %v1084, 0
        %1088 = vmatprep.subr.bf16.mxu0 0
        %1089 = vmatpush1.bf16.xpose.msra.mxu0 %v975
        %1090 = vmatprep.subr.bf16.mxu0 0
        %1091 = vmatpush1.bf16.xpose.msra.mxu0 0
        %1092 = vmatprep.subr.bf16.mxu0 0
        %1093 = vmatpush1.bf16.xpose.msra.mxu0 0
        %1094 = vmatprep.subr.bf16.mxu0 0
        %1095 = vmatpush1.bf16.xpose.msra.mxu0 0
        %1096 = vmatprep.subr.bf16.mxu0 0
        %1097 = vmatpush1.bf16.xpose.msra.mxu0 0
        %1098 = vmatprep.subr.bf16.mxu0 0
        %1099 = vmatpush1.bf16.xpose.msra.mxu0 0
        %1100 = vmatprep.subr.bf16.mxu0 0
        %1101 = vmatpush1.bf16.xpose.msra.mxu0 0
        %1102 = vmatprep.subr.bf16.mxu0 0
        %1103 = vmatpush1.bf16.xpose.msra.mxu0 0
        %1104 = vmatprep.subr.bf16.mxu0 0
        %1105 = vmatpush1.bf16.xpose.msra.mxu0 0
        %1106 = vmatprep.subr.bf16.mxu0 0
        %1107 = vmatpush1.bf16.xpose.msra.mxu0 0
        %1108 = vmatprep.subr.bf16.mxu0 0
        %1109 = vmatpush1.bf16.xpose.msra.mxu0 0
        %1110 = vmatprep.subr.bf16.mxu0 0
        %1111 = vmatpush1.bf16.xpose.msra.mxu0 0
        %1112 = vmatprep.subr.bf16.mxu0 0
        %1113 = vmatpush1.bf16.xpose.msra.mxu0 0
        %1114 = vmatprep.subr.bf16.mxu0 0
        %1115 = vmatpush1.bf16.xpose.msra.mxu0 0
        %1116 = vmatprep.subr.bf16.mxu0 0
        %1117 = vmatpush1.bf16.xpose.msra.mxu0 0
        %1118 = vmatprep.subr.bf16.mxu0 0
        %1119 = vmatpush1.bf16.xpose.msra.mxu0 0
        %1120 = vmatprep.mubr.bf16.mxu0 0
        %1121 = vmatmul.mubr.bf16.gmra.mrb[0].mxu0 %v1086
        %v1122 = vpop.f32.mrb[0].mxu0
        %v1123 = vadd.f32 0.0, %v1122
        %v1124 = vpop.f32.mrb[0].mxu0
        %v1125 = vpop.f32.mrb[0].mxu0
        %v1126 = vpop.f32.mrb[0].mxu0
        %1127 = vdwg.mxu0
        %v1128 = vsel %vm969, %v1123, -1e+30
        %v1129 = vsel %vm1018, %v1128, -inf
        %1130 = vmax.xlane.f32.xlu0 %v1129
        %v1131 = vpop.xlane.xlu0 %1130
        %v1132 = vsub.f32 %v1128, %v1131
        %v1133 = vmul.f32 %v1132, 1.442695
        %v1134 = vpow.pop %v1133
        %v1135 = vsel %vm1018, %v1134, 0.0
        %1136 = vadd.xlane.f32.xlu0 %v1135
        %v1137 = vpop.xlane.xlu0 %1136
        %v1138 = vpack.c.bf16 %v1134, %v1134
        %v1140 = vsel %vm1018, %v1138, 0
        %1142 = vmatprep.subr.bf16.mxu0 0
        %1143 = vmatpush1.bf16.msra.mxu0 %v1037
        %1144 = vmatprep.subr.bf16.mxu0 0
        %1145 = vmatpush1.bf16.msra.mxu0 0
        %1146 = vmatprep.subr.bf16.mxu0 0
        %1147 = vmatpush1.bf16.msra.mxu0 0
        %1148 = vmatprep.subr.bf16.mxu0 0
        %1149 = vmatpush1.bf16.msra.mxu0 0
        %1150 = vmatprep.subr.bf16.mxu0 0
        %1151 = vmatpush1.bf16.msra.mxu0 0
        %1152 = vmatprep.subr.bf16.mxu0 0
        %1153 = vmatpush1.bf16.msra.mxu0 0
        %1154 = vmatprep.subr.bf16.mxu0 0
        %1155 = vmatpush1.bf16.msra.mxu0 0
        %1156 = vmatprep.subr.bf16.mxu0 0
        %1157 = vmatpush1.bf16.msra.mxu0 0
        %1158 = vmatprep.subr.bf16.mxu0 0
        %1159 = vmatpush1.bf16.msra.mxu0 0
        %1160 = vmatprep.subr.bf16.mxu0 0
        %1161 = vmatpush1.bf16.msra.mxu0 0
        %1162 = vmatprep.subr.bf16.mxu0 0
        %1163 = vmatpush1.bf16.msra.mxu0 0
        %1164 = vmatprep.subr.bf16.mxu0 0
        %1165 = vmatpush1.bf16.msra.mxu0 0
        %1166 = vmatprep.subr.bf16.mxu0 0
        %1167 = vmatpush1.bf16.msra.mxu0 0
        %1168 = vmatprep.subr.bf16.mxu0 0
        %1169 = vmatpush1.bf16.msra.mxu0 0
        %1170 = vmatprep.subr.bf16.mxu0 0
        %1171 = vmatpush1.bf16.msra.mxu0 0
        %1172 = vmatprep.subr.bf16.mxu0 0
        %1173 = vmatpush1.bf16.msra.mxu0 0
        %1174 = vmatprep.mubr.bf16.mxu0 0
        %1175 = vmatmul.mubr.bf16.gmra.mrb[0].mxu0 %v1140
        %v1176 = vpop.f32.mrb[0].mxu0
        %v1177 = vadd.f32 0.0, %v1176
        %v1178 = vpop.f32.mrb[0].mxu0
        %v1179 = vpop.f32.mrb[0].mxu0
        %v1180 = vpop.f32.mrb[0].mxu0
        %1181 = vdwg.mxu0
        %v1182 = vrcp.pop %v1137
        %v1183 = vmul.f32 %v1177, %v1182
        %1185 = vrot.lane.b32.xlu0 %v1183, 32
        %v1186 = vpop.permute.xlu0 %1185
        %vm1188 = vcmask 523520
        %1189 = vst.msk [vmem:[#allocation3] sm:$0xff] %vm1188, %v1186
        %1190 = vrot.lane.b32.xlu0 %v962, 64
        %v1191 = vpop.permute.xlu0 %1190
        %1193 = vrot.lane.b32.xlu0 %v963, 96
        %v1194 = vpop.permute.xlu0 %1193
        %v1196 = vsel %vm970, %v1191, 0
        %v1199 = vsel %vm970, %v1194, 0
        %1201 = vmatprep.subr.bf16.mxu0 0
        %1202 = vmatpush1.bf16.xpose.msra.mxu0 %v1199
        %1203 = vmatprep.subr.bf16.mxu0 0
        %1204 = vmatpush1.bf16.xpose.msra.mxu0 0
        %1205 = vmatprep.subr.bf16.mxu0 0
        %1206 = vmatpush1.bf16.xpose.msra.mxu0 0
        %1207 = vmatprep.subr.bf16.mxu0 0
        %1208 = vmatpush1.bf16.xpose.msra.mxu0 0
        %1209 = vmatprep.subr.bf16.mxu0 0
        %1210 = vmatpush1.bf16.xpose.msra.mxu0 0
        %1211 = vmatprep.subr.bf16.mxu0 0
        %1212 = vmatpush1.bf16.xpose.msra.mxu0 0
        %1213 = vmatprep.subr.bf16.mxu0 0
        %1214 = vmatpush1.bf16.xpose.msra.mxu0 0
        %1215 = vmatprep.subr.bf16.mxu0 0
        %1216 = vmatpush1.bf16.xpose.msra.mxu0 0
        %1217 = vmatprep.subr.bf16.mxu0 0
        %1218 = vmatpush1.bf16.xpose.msra.mxu0 0
        %1219 = vmatprep.subr.bf16.mxu0 0
        %1220 = vmatpush1.bf16.xpose.msra.mxu0 0
        %1221 = vmatprep.subr.bf16.mxu0 0
        %1222 = vmatpush1.bf16.xpose.msra.mxu0 0
        %1223 = vmatprep.subr.bf16.mxu0 0
        %1224 = vmatpush1.bf16.xpose.msra.mxu0 0
        %1225 = vmatprep.subr.bf16.mxu0 0
        %1226 = vmatpush1.bf16.xpose.msra.mxu0 0
        %1227 = vmatprep.subr.bf16.mxu0 0
        %1228 = vmatpush1.bf16.xpose.msra.mxu0 0
        %1229 = vmatprep.subr.bf16.mxu0 0
        %1230 = vmatpush1.bf16.xpose.msra.mxu0 0
        %1231 = vmatprep.subr.bf16.mxu0 0
        %1232 = vmatpush1.bf16.xpose.msra.mxu0 0
        %1233 = vmatprep.mubr.bf16.mxu0 0
        %1234 = vmatmul.mubr.bf16.gmra.mrb[0].mxu0 %v1196
        %v1235 = vpop.f32.mrb[0].mxu0
        %v1236 = vadd.f32 0.0, %v1235
        %v1237 = vpop.f32.mrb[0].mxu0
        %v1238 = vpop.f32.mrb[0].mxu0
        %v1239 = vpop.f32.mrb[0].mxu0
        %1240 = vdwg.mxu0
        %v1241 = vsel %vm969, %v1236, -1e+30
        %v1242 = vsel %vm1018, %v1241, -inf
        %1243 = vmax.xlane.f32.xlu0 %v1242
        %v1244 = vpop.xlane.xlu0 %1243
        %v1245 = vsub.f32 %v1241, %v1244
        %v1246 = vmul.f32 %v1245, 1.442695
        %v1247 = vpow.pop %v1246
        %v1248 = vsel %vm1018, %v1247, 0.0
        %1249 = vadd.xlane.f32.xlu0 %v1248
        %v1250 = vpop.xlane.xlu0 %1249
        %v1251 = vpack.c.bf16 %v1247, %v1247
        %1252 = vrot.lane.b32.xlu0 %v964, 32
        %v1253 = vpop.permute.xlu0 %1252
        %v1255 = vsel %vm1018, %v1251, 0
        %v1258 = vsel %vm1035, %v1253, 0
        %1260 = vmatprep.subr.bf16.mxu0 0
        %1261 = vmatpush1.bf16.msra.mxu0 %v1258
        %1262 = vmatprep.subr.bf16.mxu0 0
        %1263 = vmatpush1.bf16.msra.mxu0 0
        %1264 = vmatprep.subr.bf16.mxu0 0
        %1265 = vmatpush1.bf16.msra.mxu0 0
        %1266 = vmatprep.subr.bf16.mxu0 0
        %1267 = vmatpush1.bf16.msra.mxu0 0
        %1268 = vmatprep.subr.bf16.mxu0 0
        %1269 = vmatpush1.bf16.msra.mxu0 0
        %1270 = vmatprep.subr.bf16.mxu0 0
        %1271 = vmatpush1.bf16.msra.mxu0 0
        %1272 = vmatprep.subr.bf16.mxu0 0
        %1273 = vmatpush1.bf16.msra.mxu0 0
        %1274 = vmatprep.subr.bf16.mxu0 0
        %1275 = vmatpush1.bf16.msra.mxu0 0
        %1276 = vmatprep.subr.bf16.mxu0 0
        %1277 = vmatpush1.bf16.msra.mxu0 0
        %1278 = vmatprep.subr.bf16.mxu0 0
        %1279 = vmatpush1.bf16.msra.mxu0 0
        %1280 = vmatprep.subr.bf16.mxu0 0
        %1281 = vmatpush1.bf16.msra.mxu0 0
        %1282 = vmatprep.subr.bf16.mxu0 0
        %1283 = vmatpush1.bf16.msra.mxu0 0
        %1284 = vmatprep.subr.bf16.mxu0 0
        %1285 = vmatpush1.bf16.msra.mxu0 0
        %1286 = vmatprep.subr.bf16.mxu0 0
        %1287 = vmatpush1.bf16.msra.mxu0 0
        %1288 = vmatprep.subr.bf16.mxu0 0
        %1289 = vmatpush1.bf16.msra.mxu0 0
        %1290 = vmatprep.subr.bf16.mxu0 0
        %1291 = vmatpush1.bf16.msra.mxu0 0
        %1292 = vmatprep.mubr.bf16.mxu0 0
        %1293 = vmatmul.mubr.bf16.gmra.mrb[0].mxu0 %v1255
        %v1294 = vpop.f32.mrb[0].mxu0
        %v1295 = vadd.f32 0.0, %v1294
        %v1296 = vpop.f32.mrb[0].mxu0
        %v1297 = vpop.f32.mrb[0].mxu0
        %v1298 = vpop.f32.mrb[0].mxu0
        %1299 = vdwg.mxu0
        %v1300 = vrcp.pop %v1250
        %v1301 = vmul.f32 %v1295, %v1300
        %1303 = vrot.lane.b32.xlu0 %v1301, 64
        %v1304 = vpop.permute.xlu0 %1303
        %vm1306 = vcmask 785920
        %1307 = vst.msk [vmem:[#allocation3] sm:$0xff] %vm1306, %v1304
        %1308 = vrot.lane.b32.xlu0 %v962, 32
        %v1309 = vpop.permute.xlu0 %1308
        %v1311 = vsel %vm970, %v1309, 0
        %1313 = vmatprep.subr.bf16.mxu0 0
        %1314 = vmatpush1.bf16.xpose.msra.mxu0 %v1199
        %1315 = vmatprep.subr.bf16.mxu0 0
        %1316 = vmatpush1.bf16.xpose.msra.mxu0 0
        %1317 = vmatprep.subr.bf16.mxu0 0
        %1318 = vmatpush1.bf16.xpose.msra.mxu0 0
        %1319 = vmatprep.subr.bf16.mxu0 0
        %1320 = vmatpush1.bf16.xpose.msra.mxu0 0
        %1321 = vmatprep.subr.bf16.mxu0 0
        %1322 = vmatpush1.bf16.xpose.msra.mxu0 0
        %1323 = vmatprep.subr.bf16.mxu0 0
        %1324 = vmatpush1.bf16.xpose.msra.mxu0 0
        %1325 = vmatprep.subr.bf16.mxu0 0
        %1326 = vmatpush1.bf16.xpose.msra.mxu0 0
        %1327 = vmatprep.subr.bf16.mxu0 0
        %1328 = vmatpush1.bf16.xpose.msra.mxu0 0
        %1329 = vmatprep.subr.bf16.mxu0 0
        %1330 = vmatpush1.bf16.xpose.msra.mxu0 0
        %1331 = vmatprep.subr.bf16.mxu0 0
        %1332 = vmatpush1.bf16.xpose.msra.mxu0 0
        %1333 = vmatprep.subr.bf16.mxu0 0
        %1334 = vmatpush1.bf16.xpose.msra.mxu0 0
        %1335 = vmatprep.subr.bf16.mxu0 0
        %1336 = vmatpush1.bf16.xpose.msra.mxu0 0
        %1337 = vmatprep.subr.bf16.mxu0 0
        %1338 = vmatpush1.bf16.xpose.msra.mxu0 0
        %1339 = vmatprep.subr.bf16.mxu0 0
        %1340 = vmatpush1.bf16.xpose.msra.mxu0 0
        %1341 = vmatprep.subr.bf16.mxu0 0
        %1342 = vmatpush1.bf16.xpose.msra.mxu0 0
        %1343 = vmatprep.subr.bf16.mxu0 0
        %1344 = vmatpush1.bf16.xpose.msra.mxu0 0
        %1345 = vmatprep.mubr.bf16.mxu0 0
        %1346 = vmatmul.mubr.bf16.gmra.mrb[0].mxu0 %v1311
        %v1347 = vpop.f32.mrb[0].mxu0
        %v1348 = vadd.f32 0.0, %v1347
        %v1349 = vpop.f32.mrb[0].mxu0
        %v1350 = vpop.f32.mrb[0].mxu0
        %v1351 = vpop.f32.mrb[0].mxu0
        %1352 = vdwg.mxu0
        %v1353 = vsel %vm969, %v1348, -1e+30
        %v1354 = vsel %vm1018, %v1353, -inf
        %1355 = vmax.xlane.f32.xlu0 %v1354
        %v1356 = vpop.xlane.xlu0 %1355
        %v1357 = vsub.f32 %v1353, %v1356
        %v1358 = vmul.f32 %v1357, 1.442695
        %v1359 = vpow.pop %v1358
        %v1360 = vsel %vm1018, %v1359, 0.0
        %1361 = vadd.xlane.f32.xlu0 %v1360
        %v1362 = vpop.xlane.xlu0 %1361
        %v1363 = vpack.c.bf16 %v1359, %v1359
        %v1365 = vsel %vm1018, %v1363, 0
        %1367 = vmatprep.subr.bf16.mxu0 0
        %1368 = vmatpush1.bf16.msra.mxu0 %v1258
        %1369 = vmatprep.subr.bf16.mxu0 0
        %1370 = vmatpush1.bf16.msra.mxu0 0
        %1371 = vmatprep.subr.bf16.mxu0 0
        %1372 = vmatpush1.bf16.msra.mxu0 0
        %1373 = vmatprep.subr.bf16.mxu0 0
        %1374 = vmatpush1.bf16.msra.mxu0 0
        %1375 = vmatprep.subr.bf16.mxu0 0
        %1376 = vmatpush1.bf16.msra.mxu0 0
        %1377 = vmatprep.subr.bf16.mxu0 0
        %1378 = vmatpush1.bf16.msra.mxu0 0
        %1379 = vmatprep.subr.bf16.mxu0 0
        %1380 = vmatpush1.bf16.msra.mxu0 0
        %1381 = vmatprep.subr.bf16.mxu0 0
        %1382 = vmatpush1.bf16.msra.mxu0 0
        %1383 = vmatprep.subr.bf16.mxu0 0
        %1384 = vmatpush1.bf16.msra.mxu0 0
        %1385 = vmatprep.subr.bf16.mxu0 0
        %1386 = vmatpush1.bf16.msra.mxu0 0
        %1387 = vmatprep.subr.bf16.mxu0 0
        %1388 = vmatpush1.bf16.msra.mxu0 0
        %1389 = vmatprep.subr.bf16.mxu0 0
        %1390 = vmatpush1.bf16.msra.mxu0 0
        %1391 = vmatprep.subr.bf16.mxu0 0
        %1392 = vmatpush1.bf16.msra.mxu0 0
        %1393 = vmatprep.subr.bf16.mxu0 0
        %1394 = vmatpush1.bf16.msra.mxu0 0
        %1395 = vmatprep.subr.bf16.mxu0 0
        %1396 = vmatpush1.bf16.msra.mxu0 0
        %1397 = vmatprep.subr.bf16.mxu0 0
        %1398 = vmatpush1.bf16.msra.mxu0 0
        %1399 = vmatprep.mubr.bf16.mxu0 0
        %1400 = vmatmul.mubr.bf16.gmra.mrb[0].mxu0 %v1365
        %v1401 = vpop.f32.mrb[0].mxu0
        %v1402 = vadd.f32 0.0, %v1401
        %v1403 = vpop.f32.mrb[0].mxu0
        %v1404 = vpop.f32.mrb[0].mxu0
        %v1405 = vpop.f32.mrb[0].mxu0
        %1406 = vdwg.mxu0
        %v1407 = vrcp.pop %v1362
        %v1408 = vmul.f32 %v1402, %v1407
        %1410 = vrot.lane.b32.xlu0 %v1408, 96
        %v1411 = vpop.permute.xlu0 %1410
        %vm1413 = vcmask 1048320
        %1414 = vst.msk [vmem:[#allocation3] sm:$0xff] %vm1413, %v1411
        %v1415 = vld [vmem:[#allocation3] sm:$0xff]
        %v1416 = vpack.c.bf16 %v1415, %v1415
        %v1417 = vld [vmem:[%s531] sm:$0xf]
        %v1418 = vld [vmem:[%s531 + $0x4] sm:$0xf]
        %v1419 = vld [vmem:[%s531 + $0x8] sm:$0xf]
        %v1420 = vld [vmem:[%s531 + $0xc] sm:$0xf]
        %v1421 = vld [vmem:[%s531 + $0x10] sm:$0xf]
        %v1422 = vld [vmem:[%s531 + $0x14] sm:$0xf]
        %v1423 = vld [vmem:[%s531 + $0x18] sm:$0xf]
        %v1424 = vld [vmem:[%s531 + $0x1c] sm:$0xf]
        %v1425 = vld [vmem:[%s531 + $0x20] sm:$0xf]
        %v1426 = vld [vmem:[%s531 + $0x24] sm:$0xf]
        %v1427 = vld [vmem:[%s531 + $0x28] sm:$0xf]
        %v1428 = vld [vmem:[%s531 + $0x2c] sm:$0xf]
        %v1429 = vld [vmem:[%s531 + $0x30] sm:$0xf]
        %v1430 = vld [vmem:[%s531 + $0x34] sm:$0xf]
        %v1431 = vld [vmem:[%s531 + $0x38] sm:$0xf]
        %v1432 = vld [vmem:[%s531 + $0x3c] sm:$0xf]
        %v1449 = vunpack.c.l.b16 %v1417
        %v1450 = vunpack.c.l.b16 %v1418
        %v1451 = vunpack.c.l.b16 %v1419
        %v1452 = vunpack.c.l.b16 %v1420
        %v1453 = vunpack.c.l.b16 %v1421
        %v1454 = vunpack.c.l.b16 %v1422
        %v1455 = vunpack.c.l.b16 %v1423
        %v1456 = vunpack.c.l.b16 %v1424
        %v1457 = vunpack.c.l.b16 %v1425
        %v1458 = vunpack.c.l.b16 %v1426
        %v1459 = vunpack.c.l.b16 %v1427
        %v1460 = vunpack.c.l.b16 %v1428
        %v1461 = vunpack.c.l.b16 %v1429
        %v1462 = vunpack.c.l.b16 %v1430
        %v1463 = vunpack.c.l.b16 %v1431
        %v1464 = vunpack.c.l.b16 %v1432
        %v1465 = vpack.c.b16 %v1450, %v1449
        %v1466 = vpack.c.b16 %v1452, %v1451
        %v1467 = vpack.c.b16 %v1454, %v1453
        %v1468 = vpack.c.b16 %v1456, %v1455
        %v1469 = vpack.c.b16 %v1458, %v1457
        %v1470 = vpack.c.b16 %v1460, %v1459
        %v1471 = vpack.c.b16 %v1462, %v1461
        %v1472 = vpack.c.b16 %v1464, %v1463
        %1481 = vmatprep.subr.bf16.mxu0 0
        %1482 = vmatpush1.bf16.msra.mxu0 %v1465
        %1483 = vmatprep.subr.bf16.mxu0 0
        %1484 = vmatpush1.bf16.msra.mxu0 %v1466
        %1485 = vmatprep.subr.bf16.mxu0 0
        %1486 = vmatpush1.bf16.msra.mxu0 %v1467
        %1487 = vmatprep.subr.bf16.mxu0 0
        %1488 = vmatpush1.bf16.msra.mxu0 %v1468
        %1489 = vmatprep.subr.bf16.mxu0 0
        %1490 = vmatpush1.bf16.msra.mxu0 %v1469
        %1491 = vmatprep.subr.bf16.mxu0 0
        %1492 = vmatpush1.bf16.msra.mxu0 %v1470
        %1493 = vmatprep.subr.bf16.mxu0 0
        %1494 = vmatpush1.bf16.msra.mxu0 %v1471
        %1495 = vmatprep.subr.bf16.mxu0 0
        %1496 = vmatpush1.bf16.msra.mxu0 %v1472
        %1497 = vmatprep.subr.bf16.mxu0 0
        %1498 = vmatpush1.bf16.msra.mxu0 0
        %1499 = vmatprep.subr.bf16.mxu0 0
        %1500 = vmatpush1.bf16.msra.mxu0 0
        %1501 = vmatprep.subr.bf16.mxu0 0
        %1502 = vmatpush1.bf16.msra.mxu0 0
        %1503 = vmatprep.subr.bf16.mxu0 0
        %1504 = vmatpush1.bf16.msra.mxu0 0
        %1505 = vmatprep.subr.bf16.mxu0 0
        %1506 = vmatpush1.bf16.msra.mxu0 0
        %1507 = vmatprep.subr.bf16.mxu0 0
        %1508 = vmatpush1.bf16.msra.mxu0 0
        %1509 = vmatprep.subr.bf16.mxu0 0
        %1510 = vmatpush1.bf16.msra.mxu0 0
        %1511 = vmatprep.subr.bf16.mxu0 0
        %1512 = vmatpush1.bf16.msra.mxu0 0
        %1513 = vmatprep.mubr.bf16.mxu0 0
        %1514 = vmatmul.mubr.bf16.gmra.mrb[0].mxu0 %v1416
        %v1515 = vpop.f32.mrb[0].mxu0
        %v1516 = vadd.f32 0.0, %v1515
        %v1517 = vpop.f32.mrb[0].mxu0
        %v1518 = vpop.f32.mrb[0].mxu0
        %v1519 = vpop.f32.mrb[0].mxu0
        %1520 = vdwg.mxu0
        %v1521 = vadd.f32 %v661, %v1516
        %v1522 = vmul.f32 %v1521, %v1521
        %1523 = vadd.xlane.f32.xlu0 %v1522
        %v1524 = vpop.xlane.xlu0 %1523
        %v1525 = vmul.f32 %v1524, %v667
        %v1526 = vadd.f32 %v1525, 1e-06
        %v1527 = vrsqrt.pop %v1526
        %v1528 = vmul.f32 %v1521, %v1527
        %v1529 = vld [vmem:[%s639] sm:$0x1]
        %v1531 = vlaneseq
        %v1532 = vshrl.u32 %v1531, 7
        %v1533 = vsub.s32 0, %v1532
        %v1534 = vrot.slane %v1529, %v1533
        %v1536 = vmul.f32 %v1528, %v1534
        %v1537 = vpack.c.bf16 %v1536, %v1536
        %v1538 = vld [vmem:[%s644] sm:$0xff]
        %v1539 = vld [vmem:[%s644 + $0x8] sm:$0xff]
        %v1540 = vld [vmem:[%s644 + $0x10] sm:$0xff]
        %v1541 = vld [vmem:[%s644 + $0x18] sm:$0xff]
        %v1542 = vld [vmem:[%s644 + $0x20] sm:$0xff]
        %v1543 = vld [vmem:[%s644 + $0x28] sm:$0xff]
        %v1544 = vld [vmem:[%s644 + $0x30] sm:$0xff]
        %v1545 = vld [vmem:[%s644 + $0x38] sm:$0xff]
        %v1546 = vld [vmem:[%s644 + $0x40] sm:$0xff]
        %v1547 = vld [vmem:[%s644 + $0x48] sm:$0xff]
        %v1548 = vld [vmem:[%s644 + $0x50] sm:$0xff]
        %v1549 = vld [vmem:[%s644 + $0x58] sm:$0xff]
        %v1550 = vld [vmem:[%s644 + $0x60] sm:$0xff]
        %v1551 = vld [vmem:[%s644 + $0x68] sm:$0xff]
        %v1552 = vld [vmem:[%s644 + $0x70] sm:$0xff]
        %v1553 = vld [vmem:[%s644 + $0x78] sm:$0xff]
        %v1570 = vunpack.c.l.b16 %v1538
        %v1571 = vunpack.c.h.b16 %v1538
        %v1572 = vunpack.c.l.b16 %v1539
        %v1573 = vunpack.c.h.b16 %v1539
        %v1574 = vunpack.c.l.b16 %v1540
        %v1575 = vunpack.c.h.b16 %v1540
        %v1576 = vunpack.c.l.b16 %v1541
        %v1577 = vunpack.c.h.b16 %v1541
        %v1578 = vunpack.c.l.b16 %v1542
        %v1579 = vunpack.c.h.b16 %v1542
        %v1580 = vunpack.c.l.b16 %v1543
        %v1581 = vunpack.c.h.b16 %v1543
        %v1582 = vunpack.c.l.b16 %v1544
        %v1583 = vunpack.c.h.b16 %v1544
        %v1584 = vunpack.c.l.b16 %v1545
        %v1585 = vunpack.c.h.b16 %v1545
        %v1586 = vunpack.c.l.b16 %v1546
        %v1587 = vunpack.c.h.b16 %v1546
        %v1588 = vunpack.c.l.b16 %v1547
        %v1589 = vunpack.c.h.b16 %v1547
        %v1590 = vunpack.c.l.b16 %v1548
        %v1591 = vunpack.c.h.b16 %v1548
        %v1592 = vunpack.c.l.b16 %v1549
        %v1593 = vunpack.c.h.b16 %v1549
        %v1594 = vunpack.c.l.b16 %v1550
        %v1595 = vunpack.c.h.b16 %v1550
        %v1596 = vunpack.c.l.b16 %v1551
        %v1597 = vunpack.c.h.b16 %v1551
        %v1598 = vunpack.c.l.b16 %v1552
        %v1599 = vunpack.c.h.b16 %v1552
        %v1600 = vunpack.c.l.b16 %v1553
        %v1601 = vunpack.c.h.b16 %v1553
        %v1602 = vpack.c.b16 %v1572, %v1570
        %v1603 = vpack.c.b16 %v1573, %v1571
        %v1604 = vpack.c.b16 %v1576, %v1574
        %v1605 = vpack.c.b16 %v1577, %v1575
        %v1606 = vpack.c.b16 %v1580, %v1578
        %v1607 = vpack.c.b16 %v1581, %v1579
        %v1608 = vpack.c.b16 %v1584, %v1582
        %v1609 = vpack.c.b16 %v1585, %v1583
        %v1610 = vpack.c.b16 %v1588, %v1586
        %v1611 = vpack.c.b16 %v1589, %v1587
        %v1612 = vpack.c.b16 %v1592, %v1590
        %v1613 = vpack.c.b16 %v1593, %v1591
        %v1614 = vpack.c.b16 %v1596, %v1594
        %v1615 = vpack.c.b16 %v1597, %v1595
        %v1616 = vpack.c.b16 %v1600, %v1598
        %v1617 = vpack.c.b16 %v1601, %v1599
        %1634 = vmatprep.subr.bf16.mxu0 %v1603
        %1635 = vmatpush1.bf16.msra.mxu0 %v1602
        %1636 = vmatprep.subr.bf16.mxu0 %v1605
        %1637 = vmatpush1.bf16.msra.mxu0 %v1604
        %1638 = vmatprep.subr.bf16.mxu0 %v1607
        %1639 = vmatpush1.bf16.msra.mxu0 %v1606
        %1640 = vmatprep.subr.bf16.mxu0 %v1609
        %1641 = vmatpush1.bf16.msra.mxu0 %v1608
        %1642 = vmatprep.subr.bf16.mxu0 %v1611
        %1643 = vmatpush1.bf16.msra.mxu0 %v1610
        %1644 = vmatprep.subr.bf16.mxu0 %v1613
        %1645 = vmatpush1.bf16.msra.mxu0 %v1612
        %1646 = vmatprep.subr.bf16.mxu0 %v1615
        %1647 = vmatpush1.bf16.msra.mxu0 %v1614
        %1648 = vmatprep.subr.bf16.mxu0 %v1617
        %1649 = vmatpush1.bf16.msra.mxu0 %v1616
        %1650 = vmatprep.subr.bf16.mxu0 0
        %1651 = vmatpush1.bf16.msra.mxu0 0
        %1652 = vmatprep.subr.bf16.mxu0 0
        %1653 = vmatpush1.bf16.msra.mxu0 0
        %1654 = vmatprep.subr.bf16.mxu0 0
        %1655 = vmatpush1.bf16.msra.mxu0 0
        %1656 = vmatprep.subr.bf16.mxu0 0
        %1657 = vmatpush1.bf16.msra.mxu0 0
        %1658 = vmatprep.subr.bf16.mxu0 0
        %1659 = vmatpush1.bf16.msra.mxu0 0
        %1660 = vmatprep.subr.bf16.mxu0 0
        %1661 = vmatpush1.bf16.msra.mxu0 0
        %1662 = vmatprep.subr.bf16.mxu0 0
        %1663 = vmatpush1.bf16.msra.mxu0 0
        %1664 = vmatprep.subr.bf16.mxu0 0
        %1665 = vmatpush1.bf16.msra.mxu0 0
        %1666 = vmatprep.mubr.bf16.mxu0 0
        %1667 = vmatmul.mubr.bf16.gmra.mrb[0].mxu0 %v1537
        %v1668 = vpop.f32.mrb[0].mxu0
        %v1669 = vadd.f32 0.0, %v1668
        %v1670 = vpop.f32.mrb[0].mxu0
        %v1671 = vadd.f32 0.0, %v1670
        %v1672 = vpop.f32.mrb[0].mxu0
        %v1673 = vpop.f32.mrb[0].mxu0
        %1674 = vdwg.mxu0
        %v1675 = vld [vmem:[%s649] sm:$0xff]
        %v1676 = vld [vmem:[%s649 + $0x8] sm:$0xff]
        %v1677 = vld [vmem:[%s649 + $0x10] sm:$0xff]
        %v1678 = vld [vmem:[%s649 + $0x18] sm:$0xff]
        %v1679 = vld [vmem:[%s649 + $0x20] sm:$0xff]
        %v1680 = vld [vmem:[%s649 + $0x28] sm:$0xff]
        %v1681 = vld [vmem:[%s649 + $0x30] sm:$0xff]
        %v1682 = vld [vmem:[%s649 + $0x38] sm:$0xff]
        %v1683 = vld [vmem:[%s649 + $0x40] sm:$0xff]
        %v1684 = vld [vmem:[%s649 + $0x48] sm:$0xff]
        %v1685 = vld [vmem:[%s649 + $0x50] sm:$0xff]
        %v1686 = vld [vmem:[%s649 + $0x58] sm:$0xff]
        %v1687 = vld [vmem:[%s649 + $0x60] sm:$0xff]
        %v1688 = vld [vmem:[%s649 + $0x68] sm:$0xff]
        %v1689 = vld [vmem:[%s649 + $0x70] sm:$0xff]
        %v1690 = vld [vmem:[%s649 + $0x78] sm:$0xff]
        %v1707 = vunpack.c.l.b16 %v1675
        %v1708 = vunpack.c.h.b16 %v1675
        %v1709 = vunpack.c.l.b16 %v1676
        %v1710 = vunpack.c.h.b16 %v1676
        %v1711 = vunpack.c.l.b16 %v1677
        %v1712 = vunpack.c.h.b16 %v1677
        %v1713 = vunpack.c.l.b16 %v1678
        %v1714 = vunpack.c.h.b16 %v1678
        %v1715 = vunpack.c.l.b16 %v1679
        %v1716 = vunpack.c.h.b16 %v1679
        %v1717 = vunpack.c.l.b16 %v1680
        %v1718 = vunpack.c.h.b16 %v1680
        %v1719 = vunpack.c.l.b16 %v1681
        %v1720 = vunpack.c.h.b16 %v1681
        %v1721 = vunpack.c.l.b16 %v1682
        %v1722 = vunpack.c.h.b16 %v1682
        %v1723 = vunpack.c.l.b16 %v1683
        %v1724 = vunpack.c.h.b16 %v1683
        %v1725 = vunpack.c.l.b16 %v1684
        %v1726 = vunpack.c.h.b16 %v1684
        %v1727 = vunpack.c.l.b16 %v1685
        %v1728 = vunpack.c.h.b16 %v1685
        %v1729 = vunpack.c.l.b16 %v1686
        %v1730 = vunpack.c.h.b16 %v1686
        %v1731 = vunpack.c.l.b16 %v1687
        %v1732 = vunpack.c.h.b16 %v1687
        %v1733 = vunpack.c.l.b16 %v1688
        %v1734 = vunpack.c.h.b16 %v1688
        %v1735 = vunpack.c.l.b16 %v1689
        %v1736 = vunpack.c.h.b16 %v1689
        %v1737 = vunpack.c.l.b16 %v1690
        %v1738 = vunpack.c.h.b16 %v1690
        %v1739 = vpack.c.b16 %v1709, %v1707
        %v1740 = vpack.c.b16 %v1710, %v1708
        %v1741 = vpack.c.b16 %v1713, %v1711
        %v1742 = vpack.c.b16 %v1714, %v1712
        %v1743 = vpack.c.b16 %v1717, %v1715
        %v1744 = vpack.c.b16 %v1718, %v1716
        %v1745 = vpack.c.b16 %v1721, %v1719
        %v1746 = vpack.c.b16 %v1722, %v1720
        %v1747 = vpack.c.b16 %v1725, %v1723
        %v1748 = vpack.c.b16 %v1726, %v1724
        %v1749 = vpack.c.b16 %v1729, %v1727
        %v1750 = vpack.c.b16 %v1730, %v1728
        %v1751 = vpack.c.b16 %v1733, %v1731
        %v1752 = vpack.c.b16 %v1734, %v1732
        %v1753 = vpack.c.b16 %v1737, %v1735
        %v1754 = vpack.c.b16 %v1738, %v1736
        %1771 = vmatprep.subr.bf16.mxu0 %v1740
        %1772 = vmatpush1.bf16.msra.mxu0 %v1739
        %1773 = vmatprep.subr.bf16.mxu0 %v1742
        %1774 = vmatpush1.bf16.msra.mxu0 %v1741
        %1775 = vmatprep.subr.bf16.mxu0 %v1744
        %1776 = vmatpush1.bf16.msra.mxu0 %v1743
        %1777 = vmatprep.subr.bf16.mxu0 %v1746
        %1778 = vmatpush1.bf16.msra.mxu0 %v1745
        %1779 = vmatprep.subr.bf16.mxu0 %v1748
        %1780 = vmatpush1.bf16.msra.mxu0 %v1747
        %1781 = vmatprep.subr.bf16.mxu0 %v1750
        %1782 = vmatpush1.bf16.msra.mxu0 %v1749
        %1783 = vmatprep.subr.bf16.mxu0 %v1752
        %1784 = vmatpush1.bf16.msra.mxu0 %v1751
        %1785 = vmatprep.subr.bf16.mxu0 %v1754
        %1786 = vmatpush1.bf16.msra.mxu0 %v1753
        %1787 = vmatprep.subr.bf16.mxu0 0
        %1788 = vmatpush1.bf16.msra.mxu0 0
        %1789 = vmatprep.subr.bf16.mxu0 0
        %1790 = vmatpush1.bf16.msra.mxu0 0
        %1791 = vmatprep.subr.bf16.mxu0 0
        %1792 = vmatpush1.bf16.msra.mxu0 0
        %1793 = vmatprep.subr.bf16.mxu0 0
        %1794 = vmatpush1.bf16.msra.mxu0 0
        %1795 = vmatprep.subr.bf16.mxu0 0
        %1796 = vmatpush1.bf16.msra.mxu0 0
        %1797 = vmatprep.subr.bf16.mxu0 0
        %1798 = vmatpush1.bf16.msra.mxu0 0
        %1799 = vmatprep.subr.bf16.mxu0 0
        %1800 = vmatpush1.bf16.msra.mxu0 0
        %1801 = vmatprep.subr.bf16.mxu0 0
        %1802 = vmatpush1.bf16.msra.mxu0 0
        %1803 = vmatprep.mubr.bf16.mxu0 0
        %1804 = vmatmul.mubr.bf16.gmra.mrb[0].mxu0 %v1537
        %v1805 = vpop.f32.mrb[0].mxu0
        %v1806 = vadd.f32 0.0, %v1805
        %v1807 = vpop.f32.mrb[0].mxu0
        %v1808 = vadd.f32 0.0, %v1807
        %v1809 = vpop.f32.mrb[0].mxu0
        %v1810 = vpop.f32.mrb[0].mxu0
        %1811 = vdwg.mxu0
        %v1812 = vxor.u32 %v1669, 2147483648
        %v1813 = vxor.u32 %v1671, 2147483648
        %v1814 = vmul.f32 %v1812, 1.442695
        %v1815 = vpow.pop %v1814
        %v1816 = vmul.f32 %v1813, 1.442695
        %v1817 = vpow.pop %v1816
        %v1818 = vadd.f32 %v1815, 1.0
        %v1819 = vadd.f32 %v1817, 1.0
        %v1820 = vrcp.pop %v1818
        %v1821 = vmul.f32 1.0, %v1820
        %v1822 = vrcp.pop %v1819
        %v1823 = vmul.f32 1.0, %v1822
        %v1824 = vmul.f32 %v1669, %v1821
        %v1825 = vmul.f32 %v1671, %v1823
        %v1826 = vmul.f32 %v1824, %v1806
        %v1827 = vmul.f32 %v1825, %v1808
        %v1828 = vpack.c.bf16 %v1826, %v1826
        %v1829 = vpack.c.bf16 %v1827, %v1827
        %v1830 = vld [vmem:[%s540] sm:$0xf]
        %v1831 = vld [vmem:[%s540 + $0x4] sm:$0xf]
        %v1832 = vld [vmem:[%s540 + $0x8] sm:$0xf]
        %v1833 = vld [vmem:[%s540 + $0xc] sm:$0xf]
        %v1834 = vld [vmem:[%s540 + $0x10] sm:$0xf]
        %v1835 = vld [vmem:[%s540 + $0x14] sm:$0xf]
        %v1836 = vld [vmem:[%s540 + $0x18] sm:$0xf]
        %v1837 = vld [vmem:[%s540 + $0x1c] sm:$0xf]
        %v1838 = vld [vmem:[%s540 + $0x20] sm:$0xf]
        %v1839 = vld [vmem:[%s540 + $0x24] sm:$0xf]
        %v1840 = vld [vmem:[%s540 + $0x28] sm:$0xf]
        %v1841 = vld [vmem:[%s540 + $0x2c] sm:$0xf]
        %v1842 = vld [vmem:[%s540 + $0x30] sm:$0xf]
        %v1843 = vld [vmem:[%s540 + $0x34] sm:$0xf]
        %v1844 = vld [vmem:[%s540 + $0x38] sm:$0xf]
        %v1845 = vld [vmem:[%s540 + $0x3c] sm:$0xf]
        %v1846 = vld [vmem:[%s540 + $0x40] sm:$0xf]
        %v1847 = vld [vmem:[%s540 + $0x44] sm:$0xf]
        %v1848 = vld [vmem:[%s540 + $0x48] sm:$0xf]
        %v1849 = vld [vmem:[%s540 + $0x4c] sm:$0xf]
        %v1850 = vld [vmem:[%s540 + $0x50] sm:$0xf]
        %v1851 = vld [vmem:[%s540 + $0x54] sm:$0xf]
        %v1852 = vld [vmem:[%s540 + $0x58] sm:$0xf]
        %v1853 = vld [vmem:[%s540 + $0x5c] sm:$0xf]
        %v1854 = vld [vmem:[%s540 + $0x60] sm:$0xf]
        %v1855 = vld [vmem:[%s540 + $0x64] sm:$0xf]
        %v1856 = vld [vmem:[%s540 + $0x68] sm:$0xf]
        %v1857 = vld [vmem:[%s540 + $0x6c] sm:$0xf]
        %v1858 = vld [vmem:[%s540 + $0x70] sm:$0xf]
        %v1859 = vld [vmem:[%s540 + $0x74] sm:$0xf]
        %v1860 = vld [vmem:[%s540 + $0x78] sm:$0xf]
        %v1861 = vld [vmem:[%s540 + $0x7c] sm:$0xf]
        %v1894 = vunpack.c.l.b16 %v1830
        %v1895 = vunpack.c.l.b16 %v1831
        %v1896 = vunpack.c.l.b16 %v1832
        %v1897 = vunpack.c.l.b16 %v1833
        %v1898 = vunpack.c.l.b16 %v1834
        %v1899 = vunpack.c.l.b16 %v1835
        %v1900 = vunpack.c.l.b16 %v1836
        %v1901 = vunpack.c.l.b16 %v1837
        %v1902 = vunpack.c.l.b16 %v1838
        %v1903 = vunpack.c.l.b16 %v1839
        %v1904 = vunpack.c.l.b16 %v1840
        %v1905 = vunpack.c.l.b16 %v1841
        %v1906 = vunpack.c.l.b16 %v1842
        %v1907 = vunpack.c.l.b16 %v1843
        %v1908 = vunpack.c.l.b16 %v1844
        %v1909 = vunpack.c.l.b16 %v1845
        %v1910 = vunpack.c.l.b16 %v1846
        %v1911 = vunpack.c.l.b16 %v1847
        %v1912 = vunpack.c.l.b16 %v1848
        %v1913 = vunpack.c.l.b16 %v1849
        %v1914 = vunpack.c.l.b16 %v1850
        %v1915 = vunpack.c.l.b16 %v1851
        %v1916 = vunpack.c.l.b16 %v1852
        %v1917 = vunpack.c.l.b16 %v1853
        %v1918 = vunpack.c.l.b16 %v1854
        %v1919 = vunpack.c.l.b16 %v1855
        %v1920 = vunpack.c.l.b16 %v1856
        %v1921 = vunpack.c.l.b16 %v1857
        %v1922 = vunpack.c.l.b16 %v1858
        %v1923 = vunpack.c.l.b16 %v1859
        %v1924 = vunpack.c.l.b16 %v1860
        %v1925 = vunpack.c.l.b16 %v1861
        %v1926 = vpack.c.b16 %v1895, %v1894
        %v1927 = vpack.c.b16 %v1897, %v1896
        %v1928 = vpack.c.b16 %v1899, %v1898
        %v1929 = vpack.c.b16 %v1901, %v1900
        %v1930 = vpack.c.b16 %v1903, %v1902
        %v1931 = vpack.c.b16 %v1905, %v1904
        %v1932 = vpack.c.b16 %v1907, %v1906
        %v1933 = vpack.c.b16 %v1909, %v1908
        %v1934 = vpack.c.b16 %v1911, %v1910
        %v1935 = vpack.c.b16 %v1913, %v1912
        %v1936 = vpack.c.b16 %v1915, %v1914
        %v1937 = vpack.c.b16 %v1917, %v1916
        %v1938 = vpack.c.b16 %v1919, %v1918
        %v1939 = vpack.c.b16 %v1921, %v1920
        %v1940 = vpack.c.b16 %v1923, %v1922
        %v1941 = vpack.c.b16 %v1925, %v1924
        %1958 = vmatprep.subr.bf16.mxu0 0
        %1959 = vmatpush1.bf16.msra.mxu0 %v1926
        %1960 = vmatprep.subr.bf16.mxu0 0
        %1961 = vmatpush1.bf16.msra.mxu0 %v1927
        %1962 = vmatprep.subr.bf16.mxu0 0
        %1963 = vmatpush1.bf16.msra.mxu0 %v1928
        %1964 = vmatprep.subr.bf16.mxu0 0
        %1965 = vmatpush1.bf16.msra.mxu0 %v1929
        %1966 = vmatprep.subr.bf16.mxu0 0
        %1967 = vmatpush1.bf16.msra.mxu0 %v1930
        %1968 = vmatprep.subr.bf16.mxu0 0
        %1969 = vmatpush1.bf16.msra.mxu0 %v1931
        %1970 = vmatprep.subr.bf16.mxu0 0
        %1971 = vmatpush1.bf16.msra.mxu0 %v1932
        %1972 = vmatprep.subr.bf16.mxu0 0
        %1973 = vmatpush1.bf16.msra.mxu0 %v1933
        %1974 = vmatprep.subr.bf16.mxu0 0
        %1975 = vmatpush1.bf16.msra.mxu0 %v1934
        %1976 = vmatprep.subr.bf16.mxu0 0
        %1977 = vmatpush1.bf16.msra.mxu0 %v1935
        %1978 = vmatprep.subr.bf16.mxu0 0
        %1979 = vmatpush1.bf16.msra.mxu0 %v1936
        %1980 = vmatprep.subr.bf16.mxu0 0
        %1981 = vmatpush1.bf16.msra.mxu0 %v1937
        %1982 = vmatprep.subr.bf16.mxu0 0
        %1983 = vmatpush1.bf16.msra.mxu0 %v1938
        %1984 = vmatprep.subr.bf16.mxu0 0
        %1985 = vmatpush1.bf16.msra.mxu0 %v1939
        %1986 = vmatprep.subr.bf16.mxu0 0
        %1987 = vmatpush1.bf16.msra.mxu0 %v1940
        %1988 = vmatprep.subr.bf16.mxu0 0
        %1989 = vmatpush1.bf16.msra.mxu0 %v1941
        %1990 = vmatprep.mubr.bf16.mxu0 %v1829
        %1991 = vmatmul.mubr.bf16.gmra.mrb[0].mxu0 %v1828
        %v1992 = vpop.f32.mrb[0].mxu0
        %v1993 = vadd.f32 0.0, %v1992
        %v1994 = vpop.f32.mrb[0].mxu0
        %v1995 = vpop.f32.mrb[0].mxu0
        %v1996 = vpop.f32.mrb[0].mxu0
        %1997 = vdwg.mxu0
        %v1998 = vadd.f32 %v1521, %v1993
        %1999 = vst [vmem:[#allocation2] sm:$0xff] %v1998
        %p2000 = scmp.eq.s32.totalorder %s42, 1
        // Predicated region
        $region89: #{forward.1} parent=71 // pred_check
          %p2001 = pneg %p2000
        $region90: #{forward.1} parent=71 // pred_check_branch
          %2003 = sbr.rel (%p2001) target = $region92
        $region91: #{forward.1} parent=71 // pred_region
          %s2004 = sld [smem:[#allocation5 + %s41]]
          %s2005 = ssub.s32 %s2004, 1
          %p2006 = scmp.gt.s32.totalorder %s2005, 0
          %s2007 = scalar_select %p2006, %s2005, 0
          %s2008 = scalar_lea.vmem [#allocation2], %s2007
          %v2009 = vld [vmem:[%s2008] sm:$0x1]
          %v2010 = vmul.f32 %v2009, %v2009
          %vm2011 = vcmask 1040384
          %v2012 = vsel %vm2011, %v2010, 0.0
          %2013 = vadd.xlane.f32.xlu0 %v2012
          %v2014 = vpop.xlane.xlu0 %2013
          %v2015 = vmul.f32 %v2014, %v667
          %v2016 = vadd.f32 %v2015, 1e-06
          %v2017 = vrsqrt.pop %v2016
          %v2018 = vmul.f32 %v2009, %v2017
          %v2019 = vld [vmem:[#allocation10] sm:$0x1]
          %v2020 = vmul.f32 %v2018, %v2019
          %v2021 = vld [vmem:[%s13] sm:$0x1]
          %v2022 = vmul.f32 %v2020, %v2021
          %v2023 = vsel %vm2011, %v2022, 0.0
          %2024 = vadd.xlane.f32.xlu0 %v2023
          %v2025 = vpop.xlane.xlu0 %2024
          %2026 = vst [vmem:[%s652] sm:$0x1] %v2025
        $region92: #{forward.1} parent=71 // pred_fallthru
          _
        %p2027 = scmp.lt.s32.totalorder %s41, 1
        %s2028 = scalar_select %p2027, %s41, 1
        %s2029 = scalar_lea.vmem %s14, %s2028
        // Predicated region
        $region93: #{forward.1} parent=71 // pred_check
          %p2030 = pneg %p385
        $region94: #{forward.1} parent=71 // pred_check_branch
          %2032 = sbr.rel (%p2030) target = $region96
        $region95: #{forward.1} parent=71 // pred_region
          _
        $region96: #{forward.1} parent=71 // pred_fallthru
          _
      $region72: #{forward.1} parent=5 // pred_fallthru
        _
      %p2033 = scmp.le.s32.totalorder 2, %s32
      // Predicated region
      $region97: #{forward.1} parent=5 // pred_check
        %p2034 = pneg %p2033
      $region98: #{forward.1} parent=5 // pred_check_branch
        %2036 = sbr.rel (%p2034) target = $region100
      $region99: #{forward.1} parent=5 // pred_region
        %s2037 = ssub.s32 %s32, 2
        // Predicated region
        $region101: #{forward.1} parent=99 // pred_check
          %p2038 = pneg %p391
        $region102: #{forward.1} parent=99 // pred_check_branch
          %2040 = sbr.rel (%p2038) target = $region104
        $region103: #{forward.1} parent=99 // pred_region
          %p2041 = scmp.lt.s32.totalorder %s43, 1
          %s2042 = scalar_select %p2041, %s43, 1
          %s2043 = scalar_lea.vmem %s14, %s2042
        $region104: #{forward.1} parent=99 // pred_fallthru
          _
      $region100: #{forward.1} parent=5 // pred_fallthru
        _
    $region6: #{forward.1} parent=1 // loop_footer
      %s36 = sadd.s32 1, %s32
    $region7: #{forward.1} parent=1 // loop_footer_branch
      %31 = sbr.rel target = $region3
    $region8: #{forward.1} parent=1 // loop_exit
      _
    %2044 = vsyncpa [#allocation7], 1
    %s2045 = scalar_lea.sflag [#allocation7], 1
    %2046 = vsyncpa %s2045, 1
    %2047 = vsyncpa [#allocation9], 1
    %s2048 = scalar_lea.sflag [#allocation9], 1
    %2049 = vsyncpa %s2048, 1

</llo_original>
